<compile_context>
chip_gen: v6e
topology: v6e:2x2x1
jax: 0.10.0
libtpu: 0.0.40
codegen_flags: <defaults>
</compile_context>

<pallas_src>
import functools

import jax
import jax.numpy as jnp
from jax.experimental import pallas as pl
from jax.experimental.pallas import tpu as pltpu


def _encode_block_kernel(x_ref, w_ref, scale_ref, shift_ref, o_ref, row_ref, *,
                         kh, kw, pool, w_out, wp, neg_slope):
    # x_ref:     (H_pad, W_pad, C_in)   padded NHWC image of one batch element
    # w_ref:     (kh, kw, C_in, C_out)  conv weights (HWIO)
    # scale_ref: (1, C_out)             folded BN scale  = gamma / sqrt(var+eps)
    # shift_ref: (1, C_out)             folded BN shift  = beta - mean * scale
    # o_ref:     (Wp, C_out)            pooled output row band (b, hp)
    # row_ref:   (W_out, C_out) VMEM scratch for the row-max before W-pooling
    hp = pl.program_id(1)
    band_rows = pool + kh - 1
    start = pl.multiple_of(hp * pool, pool)
    band = x_ref[pl.ds(start, band_rows), :, :]      # (band_rows, W_pad, C_in)

    scale = scale_ref[...]                            # (1, C_out), hoisted
    shift = shift_ref[...]

    # Max over the `pool` conv output rows of this band (H-direction pooling).
    pooled_rows = None
    for r in range(pool):
        # Conv output row (hp*pool + r): sum of kh*kw shifted matmuls.
        acc = None
        for dy in range(kh):
            row = band[r + dy]                        # (W_pad, C_in)
            for dx in range(kw):
                term = jnp.dot(row[dx:dx + w_out, :], w_ref[dy, dx, :, :],
                               preferred_element_type=jnp.float32)
                acc = term if acc is None else acc + term
        act = jnp.where(acc > 0, acc, neg_slope * acc)        # LeakyReLU(0.01)
        y = act * scale + shift                               # BatchNorm2d (eval)
        pooled_rows = y if pooled_rows is None else jnp.maximum(pooled_rows, y)

    # W-direction pooling via strided sublane loads from VMEM scratch.
    row_ref[...] = pooled_rows                                # (W_out, C_out)
    pooled = row_ref[pl.ds(0, wp, stride=pool), :]
    for dx in range(1, pool):
        pooled = jnp.maximum(pooled, row_ref[pl.ds(dx, wp, stride=pool), :])
    o_ref[...] = pooled.astype(o_ref.dtype)


def encode_block_forward(x, conv_w, gamma, beta, running_mean, running_var, *,
                         conv_padding, pool_kernel, eps=1e-5,
                         negative_slope=0.01):
    """x: (B, C_in, H, W) f32 NCHW. conv_w: (C_out, C_in, kh, kw).
    Returns (B, C_out, Hp, Wp) f32 (NCHW), matching EncodeBlock.eval()."""
    B, C_in, H, W = x.shape
    C_out, _, kh, kw = conv_w.shape
    p, pk = conv_padding, pool_kernel
    H_pad, W_pad = H + 2 * p, W + 2 * p
    H_out, W_out = H_pad - kh + 1, W_pad - kw + 1
    Hp, Wp = H_out // pk, W_out // pk                 # MaxPool2d floor mode

    # Layout plumbing (wrapper side): NCHW -> NHWC, zero-pad spatial dims,
    # weights OIHW -> HWIO so the kernel does (W, C_in) @ (C_in, C_out).
    x_nhwc = jnp.transpose(x, (0, 2, 3, 1)).astype(jnp.float32)
    x_padded = jnp.pad(x_nhwc, ((0, 0), (p, p), (p, p), (0, 0)))
    w_hwio = jnp.transpose(conv_w, (2, 3, 1, 0)).astype(jnp.float32)

    # Hoisted eval-mode BatchNorm affine (per-channel scale/shift).
    scale = (gamma / jnp.sqrt(running_var + eps)).astype(jnp.float32)
    shift = (beta - running_mean * scale).astype(jnp.float32)
    scale = scale.reshape(1, C_out)
    shift = shift.reshape(1, C_out)

    kernel = functools.partial(
        _encode_block_kernel, kh=kh, kw=kw, pool=pk, w_out=W_out, wp=Wp,
        neg_slope=negative_slope)

    out_nhwc = pl.pallas_call(
        kernel,
        out_shape=jax.ShapeDtypeStruct((B, Hp, Wp, C_out), jnp.float32),
        grid=(B, Hp),
        in_specs=[
            # Full padded image per batch element; block index is constant in
            # hp, so it is DMA'd once per batch element and reused.
            pl.BlockSpec((None, H_pad, W_pad, C_in), lambda b, h: (b, 0, 0, 0)),
            pl.BlockSpec((kh, kw, C_in, C_out), lambda b, h: (0, 0, 0, 0)),
            pl.BlockSpec((1, C_out), lambda b, h: (0, 0)),
            pl.BlockSpec((1, C_out), lambda b, h: (0, 0)),
        ],
        out_specs=pl.BlockSpec((None, None, Wp, C_out),
                               lambda b, h: (b, h, 0, 0)),
        scratch_shapes=[pltpu.VMEM((W_out, C_out), jnp.float32)],
        compiler_params=pltpu.CompilerParams(
            dimension_semantics=("parallel", "parallel")),
    )(x_padded, w_hwio, scale, shift)

    return jnp.transpose(out_nhwc, (0, 3, 1, 2))      # back to NCHW


def reference_forward(x, conv_w, gamma, beta, running_mean, running_var, *,
                      conv_padding, pool_kernel, eps=1e-5,
                      negative_slope=0.01):
    y = jax.lax.conv_general_dilated(
        x, conv_w, window_strides=(1, 1),
        padding=[(conv_padding, conv_padding), (conv_padding, conv_padding)],
        dimension_numbers=("NCHW", "OIHW", "NCHW"),
        precision=jax.lax.Precision.HIGHEST)
    y = jnp.where(y > 0, y, negative_slope * y)
    s = (gamma / jnp.sqrt(running_var + eps)).reshape(1, -1, 1, 1)
    b = (beta - running_mean * (gamma / jnp.sqrt(running_var + eps))).reshape(1, -1, 1, 1)
    y = y * s + b
    y = jax.lax.reduce_window(
        y, -jnp.inf, jax.lax.max,
        window_dimensions=(1, 1, pool_kernel, pool_kernel),
        window_strides=(1, 1, pool_kernel, pool_kernel),
        padding="VALID")
    return y


if __name__ == "__main__":
    key = jax.random.PRNGKey(0)
    kx, kw_, kg, kb, km, kv = jax.random.split(key, 6)

    B, C_in, C_out, H, W = 2, 4, 8, 16, 16
    conv_kernel, conv_padding, pool_kernel = 3, 1, 2

    x = jax.random.normal(kx, (B, C_in, H, W), jnp.float32)
    fan_in = C_in * conv_kernel * conv_kernel
    bound = 1.0 / fan_in ** 0.5
    conv_w = jax.random.uniform(kw_, (C_out, C_in, conv_kernel, conv_kernel),
                                jnp.float32, minval=-bound, maxval=bound)
    gamma = jax.random.uniform(kg, (C_out,), jnp.float32, minval=0.5, maxval=1.5)
    beta = 0.1 * jax.random.normal(kb, (C_out,), jnp.float32)
    running_mean = 0.1 * jax.random.normal(km, (C_out,), jnp.float32)
    running_var = jax.random.uniform(kv, (C_out,), jnp.float32,
                                     minval=0.5, maxval=1.5)

    out = encode_block_forward(x, conv_w, gamma, beta, running_mean, running_var,
                               conv_padding=conv_padding,
                               pool_kernel=pool_kernel)
    out = jax.block_until_ready(out)

    ref = reference_forward(x, conv_w, gamma, beta, running_mean, running_var,
                            conv_padding=conv_padding, pool_kernel=pool_kernel)

    assert out.shape == (B, C_out, H // pool_kernel, W // pool_kernel), out.shape
    assert out.shape == ref.shape, (out.shape, ref.shape)
    max_err = float(jnp.max(jnp.abs(out - ref)))
    assert jnp.allclose(out, ref, atol=1e-3, rtol=1e-3), (
        f"mismatch vs pure-JAX reference, max_err={max_err}")

    print("KERNEL_OK")
</pallas_src>

<mosaic_0001>
module attributes {stable_mosaic.version = 11 : i64} {
  func.func @_encode_block_kernel(%arg0: i32, %arg1: i32, %arg2: memref<1x18x18x4xf32, #tpu.memory_space<vmem>>, %arg3: memref<3x3x4x8xf32, #tpu.memory_space<vmem>>, %arg4: memref<1x8xf32, #tpu.memory_space<vmem>>, %arg5: memref<1x8xf32, #tpu.memory_space<vmem>>, %arg6: memref<1x1x8x8xf32, #tpu.memory_space<vmem>>, %arg7: memref<16x8xf32, #tpu.memory_space<vmem>>) attributes {dimension_semantics = [#tpu.dimension_semantics<parallel>, #tpu.dimension_semantics<parallel>], iteration_bounds = array<i64: 2, 8>, scalar_prefetch = 0 : i64, scratch_operands = 1 : i64, tpu.core_type = #tpu.core_type<tc>, window_params = [{transform_indices = @transform_0, window_bounds = array<i64: 1, 18, 18, 4>}, {pipeline_mode = #tpu.pipeline_mode<synchronous>, transform_indices = @transform_1, window_bounds = array<i64: 3, 3, 4, 8>}, {pipeline_mode = #tpu.pipeline_mode<synchronous>, transform_indices = @transform_2, window_bounds = array<i64: 1, 8>}, {pipeline_mode = #tpu.pipeline_mode<synchronous>, transform_indices = @transform_3, window_bounds = array<i64: 1, 8>}, {transform_indices = @transform_4, window_bounds = array<i64: 1, 1, 8, 8>}]} {
    %c2_i32 = arith.constant 2 : i32
    %0 = arith.muli %arg1, %c2_i32 : i32
    %1 = tpu.assume_multiple %0, 2 : i32
    %c0 = arith.constant 0 : index
    %2 = arith.index_cast %1 : i32 to index
    %c0_0 = arith.constant 0 : index
    %c0_1 = arith.constant 0 : index
    %3 = vector.load %arg2[%c0, %2, %c0_0, %c0_1] : memref<1x18x18x4xf32, #tpu.memory_space<vmem>>, vector<1x4x18x4xf32>
    %4 = vector.shape_cast %3 : vector<1x4x18x4xf32> to vector<4x18x4xf32>
    %c0_2 = arith.constant 0 : index
    %c0_3 = arith.constant 0 : index
    %5 = vector.load %arg4[%c0_2, %c0_3] : memref<1x8xf32, #tpu.memory_space<vmem>>, vector<1x8xf32>
    %c0_4 = arith.constant 0 : index
    %c0_5 = arith.constant 0 : index
    %6 = vector.load %arg5[%c0_4, %c0_5] : memref<1x8xf32, #tpu.memory_space<vmem>>, vector<1x8xf32>
    %7 = vector.extract_strided_slice %4 {offsets = [0, 0, 0], sizes = [1, 18, 4], strides = [1, 1, 1]} : vector<4x18x4xf32> to vector<1x18x4xf32>
    %8 = vector.shape_cast %7 : vector<1x18x4xf32> to vector<18x4xf32>
    %9 = vector.extract_strided_slice %8 {offsets = [0, 0], sizes = [16, 4], strides = [1, 1]} : vector<18x4xf32> to vector<16x4xf32>
    %c0_6 = arith.constant 0 : index
    %c0_7 = arith.constant 0 : index
    %c0_8 = arith.constant 0 : index
    %c0_9 = arith.constant 0 : index
    %10 = vector.load %arg3[%c0_6, %c0_7, %c0_8, %c0_9] : memref<3x3x4x8xf32, #tpu.memory_space<vmem>>, vector<1x1x4x8xf32>
    %11 = vector.shape_cast %10 : vector<1x1x4x8xf32> to vector<4x8xf32>
    %cst = arith.constant dense<0.000000e+00> : vector<16x8xf32>
    %12 = tpu.matmul %9, %11, %cst {dimension_numbers = #tpu.dot_dimension_numbers<[1], [0], [0], [1], [0, 0, 1, 1], [], []>} : vector<16x4xf32>, vector<4x8xf32>, vector<16x8xf32> -> vector<16x8xf32>
    %13 = vector.extract_strided_slice %8 {offsets = [1, 0], sizes = [16, 4], strides = [1, 1]} : vector<18x4xf32> to vector<16x4xf32>
    %c0_10 = arith.constant 0 : index
    %c1 = arith.constant 1 : index
    %c0_11 = arith.constant 0 : index
    %c0_12 = arith.constant 0 : index
    %14 = vector.load %arg3[%c0_10, %c1, %c0_11, %c0_12] : memref<3x3x4x8xf32, #tpu.memory_space<vmem>>, vector<1x1x4x8xf32>
    %15 = vector.shape_cast %14 : vector<1x1x4x8xf32> to vector<4x8xf32>
    %cst_13 = arith.constant dense<0.000000e+00> : vector<16x8xf32>
    %16 = tpu.matmul %13, %15, %cst_13 {dimension_numbers = #tpu.dot_dimension_numbers<[1], [0], [0], [1], [0, 0, 1, 1], [], []>} : vector<16x4xf32>, vector<4x8xf32>, vector<16x8xf32> -> vector<16x8xf32>
    %17 = arith.addf %12, %16 : vector<16x8xf32>
    %18 = vector.extract_strided_slice %8 {offsets = [2, 0], sizes = [16, 4], strides = [1, 1]} : vector<18x4xf32> to vector<16x4xf32>
    %c0_14 = arith.constant 0 : index
    %c2 = arith.constant 2 : index
    %c0_15 = arith.constant 0 : index
    %c0_16 = arith.constant 0 : index
    %19 = vector.load %arg3[%c0_14, %c2, %c0_15, %c0_16] : memref<3x3x4x8xf32, #tpu.memory_space<vmem>>, vector<1x1x4x8xf32>
    %20 = vector.shape_cast %19 : vector<1x1x4x8xf32> to vector<4x8xf32>
    %cst_17 = arith.constant dense<0.000000e+00> : vector<16x8xf32>
    %21 = tpu.matmul %18, %20, %cst_17 {dimension_numbers = #tpu.dot_dimension_numbers<[1], [0], [0], [1], [0, 0, 1, 1], [], []>} : vector<16x4xf32>, vector<4x8xf32>, vector<16x8xf32> -> vector<16x8xf32>
    %22 = arith.addf %17, %21 : vector<16x8xf32>
    %23 = vector.extract_strided_slice %4 {offsets = [1, 0, 0], sizes = [1, 18, 4], strides = [1, 1, 1]} : vector<4x18x4xf32> to vector<1x18x4xf32>
    %24 = vector.shape_cast %23 : vector<1x18x4xf32> to vector<18x4xf32>
    %25 = vector.extract_strided_slice %24 {offsets = [0, 0], sizes = [16, 4], strides = [1, 1]} : vector<18x4xf32> to vector<16x4xf32>
    %c1_18 = arith.constant 1 : index
    %c0_19 = arith.constant 0 : index
    %c0_20 = arith.constant 0 : index
    %c0_21 = arith.constant 0 : index
    %26 = vector.load %arg3[%c1_18, %c0_19, %c0_20, %c0_21] : memref<3x3x4x8xf32, #tpu.memory_space<vmem>>, vector<1x1x4x8xf32>
    %27 = vector.shape_cast %26 : vector<1x1x4x8xf32> to vector<4x8xf32>
    %cst_22 = arith.constant dense<0.000000e+00> : vector<16x8xf32>
    %28 = tpu.matmul %25, %27, %cst_22 {dimension_numbers = #tpu.dot_dimension_numbers<[1], [0], [0], [1], [0, 0, 1, 1], [], []>} : vector<16x4xf32>, vector<4x8xf32>, vector<16x8xf32> -> vector<16x8xf32>
    %29 = arith.addf %22, %28 : vector<16x8xf32>
    %30 = vector.extract_strided_slice %24 {offsets = [1, 0], sizes = [16, 4], strides = [1, 1]} : vector<18x4xf32> to vector<16x4xf32>
    %c1_23 = arith.constant 1 : index
    %c1_24 = arith.constant 1 : index
    %c0_25 = arith.constant 0 : index
    %c0_26 = arith.constant 0 : index
    %31 = vector.load %arg3[%c1_23, %c1_24, %c0_25, %c0_26] : memref<3x3x4x8xf32, #tpu.memory_space<vmem>>, vector<1x1x4x8xf32>
    %32 = vector.shape_cast %31 : vector<1x1x4x8xf32> to vector<4x8xf32>
    %cst_27 = arith.constant dense<0.000000e+00> : vector<16x8xf32>
    %33 = tpu.matmul %30, %32, %cst_27 {dimension_numbers = #tpu.dot_dimension_numbers<[1], [0], [0], [1], [0, 0, 1, 1], [], []>} : vector<16x4xf32>, vector<4x8xf32>, vector<16x8xf32> -> vector<16x8xf32>
    %34 = arith.addf %29, %33 : vector<16x8xf32>
    %35 = vector.extract_strided_slice %24 {offsets = [2, 0], sizes = [16, 4], strides = [1, 1]} : vector<18x4xf32> to vector<16x4xf32>
    %c1_28 = arith.constant 1 : index
    %c2_29 = arith.constant 2 : index
    %c0_30 = arith.constant 0 : index
    %c0_31 = arith.constant 0 : index
    %36 = vector.load %arg3[%c1_28, %c2_29, %c0_30, %c0_31] : memref<3x3x4x8xf32, #tpu.memory_space<vmem>>, vector<1x1x4x8xf32>
    %37 = vector.shape_cast %36 : vector<1x1x4x8xf32> to vector<4x8xf32>
    %cst_32 = arith.constant dense<0.000000e+00> : vector<16x8xf32>
    %38 = tpu.matmul %35, %37, %cst_32 {dimension_numbers = #tpu.dot_dimension_numbers<[1], [0], [0], [1], [0, 0, 1, 1], [], []>} : vector<16x4xf32>, vector<4x8xf32>, vector<16x8xf32> -> vector<16x8xf32>
    %39 = arith.addf %34, %38 : vector<16x8xf32>
    %40 = vector.extract_strided_slice %4 {offsets = [2, 0, 0], sizes = [1, 18, 4], strides = [1, 1, 1]} : vector<4x18x4xf32> to vector<1x18x4xf32>
    %41 = vector.shape_cast %40 : vector<1x18x4xf32> to vector<18x4xf32>
    %42 = vector.extract_strided_slice %41 {offsets = [0, 0], sizes = [16, 4], strides = [1, 1]} : vector<18x4xf32> to vector<16x4xf32>
    %c2_33 = arith.constant 2 : index
    %c0_34 = arith.constant 0 : index
    %c0_35 = arith.constant 0 : index
    %c0_36 = arith.constant 0 : index
    %43 = vector.load %arg3[%c2_33, %c0_34, %c0_35, %c0_36] : memref<3x3x4x8xf32, #tpu.memory_space<vmem>>, vector<1x1x4x8xf32>
    %44 = vector.shape_cast %43 : vector<1x1x4x8xf32> to vector<4x8xf32>
    %cst_37 = arith.constant dense<0.000000e+00> : vector<16x8xf32>
    %45 = tpu.matmul %42, %44, %cst_37 {dimension_numbers = #tpu.dot_dimension_numbers<[1], [0], [0], [1], [0, 0, 1, 1], [], []>} : vector<16x4xf32>, vector<4x8xf32>, vector<16x8xf32> -> vector<16x8xf32>
    %46 = arith.addf %39, %45 : vector<16x8xf32>
    %47 = vector.extract_strided_slice %41 {offsets = [1, 0], sizes = [16, 4], strides = [1, 1]} : vector<18x4xf32> to vector<16x4xf32>
    %c2_38 = arith.constant 2 : index
    %c1_39 = arith.constant 1 : index
    %c0_40 = arith.constant 0 : index
    %c0_41 = arith.constant 0 : index
    %48 = vector.load %arg3[%c2_38, %c1_39, %c0_40, %c0_41] : memref<3x3x4x8xf32, #tpu.memory_space<vmem>>, vector<1x1x4x8xf32>
    %49 = vector.shape_cast %48 : vector<1x1x4x8xf32> to vector<4x8xf32>
    %cst_42 = arith.constant dense<0.000000e+00> : vector<16x8xf32>
    %50 = tpu.matmul %47, %49, %cst_42 {dimension_numbers = #tpu.dot_dimension_numbers<[1], [0], [0], [1], [0, 0, 1, 1], [], []>} : vector<16x4xf32>, vector<4x8xf32>, vector<16x8xf32> -> vector<16x8xf32>
    %51 = arith.addf %46, %50 : vector<16x8xf32>
    %52 = vector.extract_strided_slice %41 {offsets = [2, 0], sizes = [16, 4], strides = [1, 1]} : vector<18x4xf32> to vector<16x4xf32>
    %c2_43 = arith.constant 2 : index
    %c2_44 = arith.constant 2 : index
    %c0_45 = arith.constant 0 : index
    %c0_46 = arith.constant 0 : index
    %53 = vector.load %arg3[%c2_43, %c2_44, %c0_45, %c0_46] : memref<3x3x4x8xf32, #tpu.memory_space<vmem>>, vector<1x1x4x8xf32>
    %54 = vector.shape_cast %53 : vector<1x1x4x8xf32> to vector<4x8xf32>
    %cst_47 = arith.constant dense<0.000000e+00> : vector<16x8xf32>
    %55 = tpu.matmul %52, %54, %cst_47 {dimension_numbers = #tpu.dot_dimension_numbers<[1], [0], [0], [1], [0, 0, 1, 1], [], []>} : vector<16x4xf32>, vector<4x8xf32>, vector<16x8xf32> -> vector<16x8xf32>
    %56 = arith.addf %51, %55 : vector<16x8xf32>
    %cst_48 = arith.constant 0.000000e+00 : f32
    %57 = vector.broadcast %cst_48 : f32 to vector<16x8xf32>
    %58 = arith.cmpf ogt, %56, %57 : vector<16x8xf32>
    %cst_49 = arith.constant 0.00999999977 : f32
    %59 = vector.broadcast %cst_49 : f32 to vector<16x8xf32>
    %60 = arith.mulf %59, %56 : vector<16x8xf32>
    %61 = arith.select %58, %56, %60 : vector<16x8xi1>, vector<16x8xf32>
    %62 = vector.broadcast %5 : vector<1x8xf32> to vector<16x8xf32>
    %63 = arith.mulf %61, %62 : vector<16x8xf32>
    %64 = vector.broadcast %6 : vector<1x8xf32> to vector<16x8xf32>
    %65 = arith.addf %63, %64 : vector<16x8xf32>
    %66 = vector.extract_strided_slice %4 {offsets = [1, 0, 0], sizes = [1, 18, 4], strides = [1, 1, 1]} : vector<4x18x4xf32> to vector<1x18x4xf32>
    %67 = vector.shape_cast %66 : vector<1x18x4xf32> to vector<18x4xf32>
    %68 = vector.extract_strided_slice %67 {offsets = [0, 0], sizes = [16, 4], strides = [1, 1]} : vector<18x4xf32> to vector<16x4xf32>
    %c0_50 = arith.constant 0 : index
    %c0_51 = arith.constant 0 : index
    %c0_52 = arith.constant 0 : index
    %c0_53 = arith.constant 0 : index
    %69 = vector.load %arg3[%c0_50, %c0_51, %c0_52, %c0_53] : memref<3x3x4x8xf32, #tpu.memory_space<vmem>>, vector<1x1x4x8xf32>
    %70 = vector.shape_cast %69 : vector<1x1x4x8xf32> to vector<4x8xf32>
    %cst_54 = arith.constant dense<0.000000e+00> : vector<16x8xf32>
    %71 = tpu.matmul %68, %70, %cst_54 {dimension_numbers = #tpu.dot_dimension_numbers<[1], [0], [0], [1], [0, 0, 1, 1], [], []>} : vector<16x4xf32>, vector<4x8xf32>, vector<16x8xf32> -> vector<16x8xf32>
    %72 = vector.extract_strided_slice %67 {offsets = [1, 0], sizes = [16, 4], strides = [1, 1]} : vector<18x4xf32> to vector<16x4xf32>
    %c0_55 = arith.constant 0 : index
    %c1_56 = arith.constant 1 : index
    %c0_57 = arith.constant 0 : index
    %c0_58 = arith.constant 0 : index
    %73 = vector.load %arg3[%c0_55, %c1_56, %c0_57, %c0_58] : memref<3x3x4x8xf32, #tpu.memory_space<vmem>>, vector<1x1x4x8xf32>
    %74 = vector.shape_cast %73 : vector<1x1x4x8xf32> to vector<4x8xf32>
    %cst_59 = arith.constant dense<0.000000e+00> : vector<16x8xf32>
    %75 = tpu.matmul %72, %74, %cst_59 {dimension_numbers = #tpu.dot_dimension_numbers<[1], [0], [0], [1], [0, 0, 1, 1], [], []>} : vector<16x4xf32>, vector<4x8xf32>, vector<16x8xf32> -> vector<16x8xf32>
    %76 = arith.addf %71, %75 : vector<16x8xf32>
    %77 = vector.extract_strided_slice %67 {offsets = [2, 0], sizes = [16, 4], strides = [1, 1]} : vector<18x4xf32> to vector<16x4xf32>
    %c0_60 = arith.constant 0 : index
    %c2_61 = arith.constant 2 : index
    %c0_62 = arith.constant 0 : index
    %c0_63 = arith.constant 0 : index
    %78 = vector.load %arg3[%c0_60, %c2_61, %c0_62, %c0_63] : memref<3x3x4x8xf32, #tpu.memory_space<vmem>>, vector<1x1x4x8xf32>
    %79 = vector.shape_cast %78 : vector<1x1x4x8xf32> to vector<4x8xf32>
    %cst_64 = arith.constant dense<0.000000e+00> : vector<16x8xf32>
    %80 = tpu.matmul %77, %79, %cst_64 {dimension_numbers = #tpu.dot_dimension_numbers<[1], [0], [0], [1], [0, 0, 1, 1], [], []>} : vector<16x4xf32>, vector<4x8xf32>, vector<16x8xf32> -> vector<16x8xf32>
    %81 = arith.addf %76, %80 : vector<16x8xf32>
    %82 = vector.extract_strided_slice %4 {offsets = [2, 0, 0], sizes = [1, 18, 4], strides = [1, 1, 1]} : vector<4x18x4xf32> to vector<1x18x4xf32>
    %83 = vector.shape_cast %82 : vector<1x18x4xf32> to vector<18x4xf32>
    %84 = vector.extract_strided_slice %83 {offsets = [0, 0], sizes = [16, 4], strides = [1, 1]} : vector<18x4xf32> to vector<16x4xf32>
    %c1_65 = arith.constant 1 : index
    %c0_66 = arith.constant 0 : index
    %c0_67 = arith.constant 0 : index
    %c0_68 = arith.constant 0 : index
    %85 = vector.load %arg3[%c1_65, %c0_66, %c0_67, %c0_68] : memref<3x3x4x8xf32, #tpu.memory_space<vmem>>, vector<1x1x4x8xf32>
    %86 = vector.shape_cast %85 : vector<1x1x4x8xf32> to vector<4x8xf32>
    %cst_69 = arith.constant dense<0.000000e+00> : vector<16x8xf32>
    %87 = tpu.matmul %84, %86, %cst_69 {dimension_numbers = #tpu.dot_dimension_numbers<[1], [0], [0], [1], [0, 0, 1, 1], [], []>} : vector<16x4xf32>, vector<4x8xf32>, vector<16x8xf32> -> vector<16x8xf32>
    %88 = arith.addf %81, %87 : vector<16x8xf32>
    %89 = vector.extract_strided_slice %83 {offsets = [1, 0], sizes = [16, 4], strides = [1, 1]} : vector<18x4xf32> to vector<16x4xf32>
    %c1_70 = arith.constant 1 : index
    %c1_71 = arith.constant 1 : index
    %c0_72 = arith.constant 0 : index
    %c0_73 = arith.constant 0 : index
    %90 = vector.load %arg3[%c1_70, %c1_71, %c0_72, %c0_73] : memref<3x3x4x8xf32, #tpu.memory_space<vmem>>, vector<1x1x4x8xf32>
    %91 = vector.shape_cast %90 : vector<1x1x4x8xf32> to vector<4x8xf32>
    %cst_74 = arith.constant dense<0.000000e+00> : vector<16x8xf32>
    %92 = tpu.matmul %89, %91, %cst_74 {dimension_numbers = #tpu.dot_dimension_numbers<[1], [0], [0], [1], [0, 0, 1, 1], [], []>} : vector<16x4xf32>, vector<4x8xf32>, vector<16x8xf32> -> vector<16x8xf32>
    %93 = arith.addf %88, %92 : vector<16x8xf32>
    %94 = vector.extract_strided_slice %83 {offsets = [2, 0], sizes = [16, 4], strides = [1, 1]} : vector<18x4xf32> to vector<16x4xf32>
    %c1_75 = arith.constant 1 : index
    %c2_76 = arith.constant 2 : index
    %c0_77 = arith.constant 0 : index
    %c0_78 = arith.constant 0 : index
    %95 = vector.load %arg3[%c1_75, %c2_76, %c0_77, %c0_78] : memref<3x3x4x8xf32, #tpu.memory_space<vmem>>, vector<1x1x4x8xf32>
    %96 = vector.shape_cast %95 : vector<1x1x4x8xf32> to vector<4x8xf32>
    %cst_79 = arith.constant dense<0.000000e+00> : vector<16x8xf32>
    %97 = tpu.matmul %94, %96, %cst_79 {dimension_numbers = #tpu.dot_dimension_numbers<[1], [0], [0], [1], [0, 0, 1, 1], [], []>} : vector<16x4xf32>, vector<4x8xf32>, vector<16x8xf32> -> vector<16x8xf32>
    %98 = arith.addf %93, %97 : vector<16x8xf32>
    %99 = vector.extract_strided_slice %4 {offsets = [3, 0, 0], sizes = [1, 18, 4], strides = [1, 1, 1]} : vector<4x18x4xf32> to vector<1x18x4xf32>
    %100 = vector.shape_cast %99 : vector<1x18x4xf32> to vector<18x4xf32>
    %101 = vector.extract_strided_slice %100 {offsets = [0, 0], sizes = [16, 4], strides = [1, 1]} : vector<18x4xf32> to vector<16x4xf32>
    %c2_80 = arith.constant 2 : index
    %c0_81 = arith.constant 0 : index
    %c0_82 = arith.constant 0 : index
    %c0_83 = arith.constant 0 : index
    %102 = vector.load %arg3[%c2_80, %c0_81, %c0_82, %c0_83] : memref<3x3x4x8xf32, #tpu.memory_space<vmem>>, vector<1x1x4x8xf32>
    %103 = vector.shape_cast %102 : vector<1x1x4x8xf32> to vector<4x8xf32>
    %cst_84 = arith.constant dense<0.000000e+00> : vector<16x8xf32>
    %104 = tpu.matmul %101, %103, %cst_84 {dimension_numbers = #tpu.dot_dimension_numbers<[1], [0], [0], [1], [0, 0, 1, 1], [], []>} : vector<16x4xf32>, vector<4x8xf32>, vector<16x8xf32> -> vector<16x8xf32>
    %105 = arith.addf %98, %104 : vector<16x8xf32>
    %106 = vector.extract_strided_slice %100 {offsets = [1, 0], sizes = [16, 4], strides = [1, 1]} : vector<18x4xf32> to vector<16x4xf32>
    %c2_85 = arith.constant 2 : index
    %c1_86 = arith.constant 1 : index
    %c0_87 = arith.constant 0 : index
    %c0_88 = arith.constant 0 : index
    %107 = vector.load %arg3[%c2_85, %c1_86, %c0_87, %c0_88] : memref<3x3x4x8xf32, #tpu.memory_space<vmem>>, vector<1x1x4x8xf32>
    %108 = vector.shape_cast %107 : vector<1x1x4x8xf32> to vector<4x8xf32>
    %cst_89 = arith.constant dense<0.000000e+00> : vector<16x8xf32>
    %109 = tpu.matmul %106, %108, %cst_89 {dimension_numbers = #tpu.dot_dimension_numbers<[1], [0], [0], [1], [0, 0, 1, 1], [], []>} : vector<16x4xf32>, vector<4x8xf32>, vector<16x8xf32> -> vector<16x8xf32>
    %110 = arith.addf %105, %109 : vector<16x8xf32>
    %111 = vector.extract_strided_slice %100 {offsets = [2, 0], sizes = [16, 4], strides = [1, 1]} : vector<18x4xf32> to vector<16x4xf32>
    %c2_90 = arith.constant 2 : index
    %c2_91 = arith.constant 2 : index
    %c0_92 = arith.constant 0 : index
    %c0_93 = arith.constant 0 : index
    %112 = vector.load %arg3[%c2_90, %c2_91, %c0_92, %c0_93] : memref<3x3x4x8xf32, #tpu.memory_space<vmem>>, vector<1x1x4x8xf32>
    %113 = vector.shape_cast %112 : vector<1x1x4x8xf32> to vector<4x8xf32>
    %cst_94 = arith.constant dense<0.000000e+00> : vector<16x8xf32>
    %114 = tpu.matmul %111, %113, %cst_94 {dimension_numbers = #tpu.dot_dimension_numbers<[1], [0], [0], [1], [0, 0, 1, 1], [], []>} : vector<16x4xf32>, vector<4x8xf32>, vector<16x8xf32> -> vector<16x8xf32>
    %115 = arith.addf %110, %114 : vector<16x8xf32>
    %cst_95 = arith.constant 0.000000e+00 : f32
    %116 = vector.broadcast %cst_95 : f32 to vector<16x8xf32>
    %117 = arith.cmpf ogt, %115, %116 : vector<16x8xf32>
    %cst_96 = arith.constant 0.00999999977 : f32
    %118 = vector.broadcast %cst_96 : f32 to vector<16x8xf32>
    %119 = arith.mulf %118, %115 : vector<16x8xf32>
    %120 = arith.select %117, %115, %119 : vector<16x8xi1>, vector<16x8xf32>
    %121 = vector.broadcast %5 : vector<1x8xf32> to vector<16x8xf32>
    %122 = arith.mulf %120, %121 : vector<16x8xf32>
    %123 = vector.broadcast %6 : vector<1x8xf32> to vector<16x8xf32>
    %124 = arith.addf %122, %123 : vector<16x8xf32>
    %125 = arith.maximumf %65, %124 : vector<16x8xf32>
    %c0_97 = arith.constant 0 : index
    %c0_98 = arith.constant 0 : index
    %126 = vector.load %arg7[%c0_97, %c0_98] : memref<16x8xf32, #tpu.memory_space<vmem>>, vector<16x8xf32>
    tpu.vector_store %arg7[%c0_97, %c0_98], %125 {strides = array<i32>} : memref<16x8xf32, #tpu.memory_space<vmem>>, vector<16x8xf32>,
    %c0_99 = arith.constant 0 : index
    %c0_100 = arith.constant 0 : index
    %127 = tpu.strided_load %arg7[%c0_99, %c0_100] {strides = array<i32: 2, 1>} : memref<16x8xf32, #tpu.memory_space<vmem>>, vector<8x8xf32>
    %c1_101 = arith.constant 1 : index
    %c0_102 = arith.constant 0 : index
    %128 = tpu.strided_load %arg7[%c1_101, %c0_102] {strides = array<i32: 2, 1>} : memref<16x8xf32, #tpu.memory_space<vmem>>, vector<8x8xf32>
    %129 = arith.maximumf %127, %128 : vector<8x8xf32>
    %c0_103 = arith.constant 0 : index
    %c0_104 = arith.constant 0 : index
    %c0_105 = arith.constant 0 : index
    %c0_106 = arith.constant 0 : index
    %130 = vector.load %arg6[%c0_103, %c0_104, %c0_105, %c0_106] : memref<1x1x8x8xf32, #tpu.memory_space<vmem>>, vector<1x1x8x8xf32>
    %131 = vector.shape_cast %130 : vector<1x1x8x8xf32> to vector<8x8xf32>
    %132 = vector.shape_cast %129 : vector<8x8xf32> to vector<1x1x8x8xf32>
    tpu.vector_store %arg6[%c0_103, %c0_104, %c0_105, %c0_106], %132 {strides = array<i32>} : memref<1x1x8x8xf32, #tpu.memory_space<vmem>>, vector<1x1x8x8xf32>,
    return
  }
  func.func @transform_0(%arg0: i32, %arg1: i32) -> (i32, i32, i32, i32) {
    %c0_i32 = arith.constant 0 : i32
    %c0_i32_0 = arith.constant 0 : i32
    %c0_i32_1 = arith.constant 0 : i32
    %c0_i32_2 = arith.constant 0 : i32
    return %arg0, %c0_i32, %c0_i32_0, %c0_i32_1 : i32, i32, i32, i32
  }
  func.func @transform_1(%arg0: i32, %arg1: i32) -> (i32, i32, i32, i32) {
    %c0_i32 = arith.constant 0 : i32
    %c0_i32_0 = arith.constant 0 : i32
    %c0_i32_1 = arith.constant 0 : i32
    %c0_i32_2 = arith.constant 0 : i32
    %c0_i32_3 = arith.constant 0 : i32
    return %c0_i32, %c0_i32_0, %c0_i32_1, %c0_i32_2 : i32, i32, i32, i32
  }
  func.func @transform_2(%arg0: i32, %arg1: i32) -> (i32, i32) {
    %c0_i32 = arith.constant 0 : i32
    %c0_i32_0 = arith.constant 0 : i32
    %c0_i32_1 = arith.constant 0 : i32
    return %c0_i32, %c0_i32_0 : i32, i32
  }
  func.func @transform_3(%arg0: i32, %arg1: i32) -> (i32, i32) {
    %c0_i32 = arith.constant 0 : i32
    %c0_i32_0 = arith.constant 0 : i32
    %c0_i32_1 = arith.constant 0 : i32
    return %c0_i32, %c0_i32_0 : i32, i32
  }
  func.func @transform_4(%arg0: i32, %arg1: i32) -> (i32, i32, i32, i32) {
    %c0_i32 = arith.constant 0 : i32
    %c0_i32_0 = arith.constant 0 : i32
    %c0_i32_1 = arith.constant 0 : i32
    return %arg0, %arg1, %c0_i32, %c0_i32_0 : i32, i32, i32, i32
  }
}

</mosaic_0001>

<llo_original>
// kernel: tpu_custom_call.1
$region0: #{tpu_custom_call.1}
  #allocation0 [shape = 'u32[]', space=smem, size = 0x4, offset = 0x4, fixed_abs, tag = 'smem constant byte address 0x4 - core index']
  #allocation1 [shape = 'u32[144,128]{1,0:T(1,128)}', space=vmem, size = 0x12000, scoped, tag = 'internal scratch']
  #allocation2 [shape = 'f32[16,8]{1,0:T(8,128)}', space=vmem, size = 0x2000, scoped, tag = 'scratch operand']
  %s0 = inlined_call_operand.vmem [shape: f32[2,18,18,4], index: 0, kind: input, shape index: {}]
  %s1 = inlined_call_operand.vmem [shape: f32[3,3,4,8], index: 1, kind: input, shape index: {}]
  %s2 = inlined_call_operand.vmem [shape: f32[1,8], index: 2, kind: input, shape index: {}]
  %s3 = inlined_call_operand.vmem [shape: f32[1,8], index: 3, kind: input, shape index: {}]
  %s4 = inlined_call_operand.hbm [shape: f32[2,8,8,8], index: 4, kind: output, shape index: {}]
  %s5 = sld [smem:[#allocation0]]
  $region49: #{tpu_custom_call.1} parent=0
    _
  %s7 = ssub.s32 1, %s5
  %s8 = scalar_select 0, %s7, %s5
  $region1: #{tpu_custom_call.1} parent=0
    #allocation3 [shape = 'u8[8192]{0}', space=vmem, size = 0x2000, scoped, tag = 'output window, operand 0']
    #allocation4 [shape = 's32[2]{0}', space=sflag, size = 0x8, scoped, tag = 'scoped memory for tpu_custom_call.1']
    %9 = vsyncpa [#allocation4], 0
    %s10 = scalar_lea.sflag [#allocation4], 1
    %11 = vsyncpa %s10, 0
    loop: start=0, step=1, limit=18
    $region2: #{tpu_custom_call.1} parent=1 // loop_pre_header
      _
    $region3: #{tpu_custom_call.1} parent=1 // loop_header
      %s13 = sphi 0, %s17
      %p14 = scmp.ge.s32.totalorder %s13, 18
      %s20 = sphi 0, %s32
      %s21 = sphi 0, %s28
      %s22 = sphi 0, %s20
      %s23 = sphi 0, %s21
      %s24 = sphi 0, %s22
      %s25 = sphi 0, %s23
      %s35 = sphi 0, %s37
      %s38 = sphi 0, %s35
      %s39 = sphi 0, %s38
      %s55 = sphi 0, %s39
      %s59 = sphi 0, %s59
      %s61 = sphi 0, %s59
      %s62 = sphi 0, %s61
      %s76 = sphi 0, %s62
      %s80 = sphi 0, %s80
      %s82 = sphi 0, %s80
      %s83 = sphi 0, %s82
      %s97 = sphi 0, %s83
      %s101 = sphi 0, %s101
      %s103 = sphi 0, %s101
      %s104 = sphi 0, %s103
      %s118 = sphi 0, %s104
      %s126 = sphi 0, %s128
      %s129 = sphi 0, %s126
      %s130 = sphi 0, %s129
      %s146 = sphi 0, %s130
    $region4: #{tpu_custom_call.1} parent=1 // loop_header_branch
      %16 = sbr.rel (%p14) target = $region8
    $region5: #{tpu_custom_call.1} parent=1 // loop_body
      %s18 = ssub.s32 %s13, 1
      %s19 = ssub.s32 %s13, 2
      %s26 = sadd.s32 1, %s21
      %p27 = scmp.ge.s32.totalorder %s26, 8
      %s28 = scalar_select %p27, 0, %s26
      %s29 = sadd.s32 1, %s20
      %s30 = scalar_select %p27, %s29, %s20
      %p31 = scmp.ge.s32.totalorder %s30, 2
      %s32 = scalar_select %p31, 0, %s30
      %s33 = ssub.s32 %s20, %s32
      %p34 = scmp.eq.s32.totalorder %s33, 0
      %s36 = sadd.s32 %s35, 1
      %s37 = scalar_select %p34, %s35, %s36
      %p40 = pneg %p34
      %p41 = scmp.eq.s32.totalorder %s13, 15
      %p42 = por %p40, %p41
      %p43 = scmp.ne.s32.totalorder %s35, %s38
      %p44 = scmp.eq.s32.totalorder %s13, 0
      %p45 = por %p43, %p44
      %p46 = scmp.ne.s32.totalorder %s35, %s38
      %p47 = scmp.eq.s32.totalorder %s18, 15
      %p48 = por %p46, %p47
      %p49 = scmp.ne.s32.totalorder %s38, %s39
      %p50 = scmp.eq.s32.totalorder %s18, 0
      %p51 = por %p49, %p50
      %p52 = scmp.ne.s32.totalorder %s38, %s39
      %p53 = scmp.eq.s32.totalorder %s19, 15
      %p54 = por %p52, %p53
      %p56 = scmp.ne.s32.totalorder %s39, %s55
      %p57 = scmp.eq.s32.totalorder %s19, 0
      %p58 = por %p56, %p57
      %s60 = sadd.s32 %s59, 1
      %p63 = scmp.eq.s32.totalorder %s13, 15
      %p64 = scmp.ne.s32.totalorder %s59, %s61
      %p65 = scmp.eq.s32.totalorder %s13, 0
      %p66 = por %p64, %p65
      %p67 = scmp.ne.s32.totalorder %s59, %s61
      %p68 = scmp.eq.s32.totalorder %s18, 15
      %p69 = por %p67, %p68
      %p70 = scmp.ne.s32.totalorder %s61, %s62
      %p71 = scmp.eq.s32.totalorder %s18, 0
      %p72 = por %p70, %p71
      %p73 = scmp.ne.s32.totalorder %s61, %s62
      %p74 = scmp.eq.s32.totalorder %s19, 15
      %p75 = por %p73, %p74
      %p77 = scmp.ne.s32.totalorder %s62, %s76
      %p78 = scmp.eq.s32.totalorder %s19, 0
      %p79 = por %p77, %p78
      %s81 = sadd.s32 %s80, 1
      %p84 = scmp.eq.s32.totalorder %s13, 15
      %p85 = scmp.ne.s32.totalorder %s80, %s82
      %p86 = scmp.eq.s32.totalorder %s13, 0
      %p87 = por %p85, %p86
      %p88 = scmp.ne.s32.totalorder %s80, %s82
      %p89 = scmp.eq.s32.totalorder %s18, 15
      %p90 = por %p88, %p89
      %p91 = scmp.ne.s32.totalorder %s82, %s83
      %p92 = scmp.eq.s32.totalorder %s18, 0
      %p93 = por %p91, %p92
      %p94 = scmp.ne.s32.totalorder %s82, %s83
      %p95 = scmp.eq.s32.totalorder %s19, 15
      %p96 = por %p94, %p95
      %p98 = scmp.ne.s32.totalorder %s83, %s97
      %p99 = scmp.eq.s32.totalorder %s19, 0
      %p100 = por %p98, %p99
      %s102 = sadd.s32 %s101, 1
      %p105 = scmp.eq.s32.totalorder %s13, 15
      %p106 = scmp.ne.s32.totalorder %s101, %s103
      %p107 = scmp.eq.s32.totalorder %s13, 0
      %p108 = por %p106, %p107
      %p109 = scmp.ne.s32.totalorder %s101, %s103
      %p110 = scmp.eq.s32.totalorder %s18, 15
      %p111 = por %p109, %p110
      %p112 = scmp.ne.s32.totalorder %s103, %s104
      %p113 = scmp.eq.s32.totalorder %s18, 0
      %p114 = por %p112, %p113
      %p115 = scmp.ne.s32.totalorder %s103, %s104
      %p116 = scmp.eq.s32.totalorder %s19, 15
      %p117 = por %p115, %p116
      %p119 = scmp.ne.s32.totalorder %s104, %s118
      %p120 = scmp.eq.s32.totalorder %s19, 0
      %p121 = por %p119, %p120
      %s122 = ssub.s32 %s20, %s32
      %s123 = ssub.s32 %s21, %s28
      %s124 = sor.u32 %s122, %s123
      %p125 = scmp.eq.s32.totalorder %s124, 0
      %s127 = sadd.s32 %s126, 1
      %s128 = scalar_select %p125, %s126, %s127
      %p131 = pneg %p125
      %p132 = scmp.eq.s32.totalorder %s13, 15
      %p133 = por %p131, %p132
      %p134 = scmp.ne.s32.totalorder %s126, %s129
      %p135 = scmp.eq.s32.totalorder %s13, 0
      %p136 = por %p134, %p135
      %p137 = scmp.ne.s32.totalorder %s126, %s129
      %p138 = scmp.eq.s32.totalorder %s18, 15
      %p139 = por %p137, %p138
      %p140 = scmp.ne.s32.totalorder %s129, %s130
      %p141 = scmp.eq.s32.totalorder %s18, 0
      %p142 = por %p140, %p141
      %p143 = scmp.ne.s32.totalorder %s129, %s130
      %p144 = scmp.eq.s32.totalorder %s19, 15
      %p145 = por %p143, %p144
      %p147 = scmp.ne.s32.totalorder %s130, %s146
      %p148 = scmp.eq.s32.totalorder %s19, 0
      %p149 = por %p147, %p148
      %p150 = scmp.le.s32.totalorder 1, %s13
      %p151 = scmp.lt.s32.totalorder %s13, 17
      %p152 = pnand %p150, %p151
      %p153 = pneg %p152
      // Predicated region
      $region9: #{tpu_custom_call.1} parent=5 // pred_check
        _
      $region10: #{tpu_custom_call.1} parent=5 // pred_check_branch
        %155 = sbr.rel (%p152) target = $region12
      $region11: #{tpu_custom_call.1} parent=5 // pred_region
        %s156 = ssub.s32 %s13, 1
        // Predicated region
        $region13: #{tpu_custom_call.1} parent=11 // pred_check
          %p157 = pneg %p72
        $region14: #{tpu_custom_call.1} parent=11 // pred_check_branch
          %159 = sbr.rel (%p157) target = $region16
        $region15: #{tpu_custom_call.1} parent=11 // pred_region
          _
        $region16: #{tpu_custom_call.1} parent=11 // pred_fallthru
          _
        // Predicated region
        $region17: #{tpu_custom_call.1} parent=11 // pred_check
          %p160 = pneg %p93
        $region18: #{tpu_custom_call.1} parent=11 // pred_check_branch
          %162 = sbr.rel (%p160) target = $region20
        $region19: #{tpu_custom_call.1} parent=11 // pred_region
          _
        $region20: #{tpu_custom_call.1} parent=11 // pred_fallthru
          _
        // Predicated region
        $region21: #{tpu_custom_call.1} parent=11 // pred_check
          %p163 = pneg %p114
        $region22: #{tpu_custom_call.1} parent=11 // pred_check_branch
          %165 = sbr.rel (%p163) target = $region24
        $region23: #{tpu_custom_call.1} parent=11 // pred_region
          _
        $region24: #{tpu_custom_call.1} parent=11 // pred_fallthru
          _
      $region12: #{tpu_custom_call.1} parent=5 // pred_fallthru
        _
      %p166 = scmp.lt.s32.totalorder %s13, 16
      // Predicated region
      $region25: #{tpu_custom_call.1} parent=5 // pred_check
        %p167 = pneg %p166
      $region26: #{tpu_custom_call.1} parent=5 // pred_check_branch
        %169 = sbr.rel (%p167) target = $region28
      $region27: #{tpu_custom_call.1} parent=5 // pred_region
        // Predicated region
        $region29: #{tpu_custom_call.1} parent=27 // pred_check
          %p170 = pneg %p45
        $region30: #{tpu_custom_call.1} parent=27 // pred_check_branch
          %172 = sbr.rel (%p170) target = $region32
        $region31: #{tpu_custom_call.1} parent=27 // pred_region
          %p173 = scmp.lt.s32.totalorder %s20, 1
          %s174 = scalar_select %p173, %s20, 1
          %s175 = smul.addr %s174, 54
          %s176 = smul.addr %s175, 8
          %s177 = scalar_lea.vmem %s0, %s176
        $region32: #{tpu_custom_call.1} parent=27 // pred_fallthru
          _
      $region28: #{tpu_custom_call.1} parent=5 // pred_fallthru
        _
      %p178 = scmp.le.s32.totalorder 1, %s13
      %p179 = scmp.lt.s32.totalorder %s13, 17
      %p180 = pnand %p178, %p179
      %p181 = pneg %p180
      // Predicated region
      $region33: #{tpu_custom_call.1} parent=5 // pred_check
        _
      $region34: #{tpu_custom_call.1} parent=5 // pred_check_branch
        %183 = sbr.rel (%p180) target = $region36
      $region35: #{tpu_custom_call.1} parent=5 // pred_region
        %s184 = ssub.s32 %s13, 1
        %p185 = scmp.lt.s32.totalorder %s22, 1
        %s186 = scalar_select %p185, %s22, 1
        %s187 = smul.addr %s186, 54
        %s188 = smul.addr %s187, 8
        %s189 = scalar_lea.vmem %s0, %s188
        %p190 = pneg %p51
        %p191 = pneg %p48
        %p192 = pneg %p72
        %p193 = pneg %p69
        %p194 = pneg %p93
        %p195 = pneg %p90
        %p196 = pneg %p114
        %p197 = pneg %p111
        %p198 = pneg %p142
        %p199 = pneg %p139
        %s200 = sand.u32 %s129, 1
        %s201 = scalar_lea.sflag [#allocation4], %s200
        %s202 = sand.u32 %s129, 1
        %s203 = smul.addr %s202, 8
        %s204 = scalar_lea.vmem [#allocation3], %s203
        %p205 = scmp.lt.s32.totalorder %s22, 1
        %s206 = scalar_select %p205, %s22, 1
        %s207 = smul.addr %s206, 54
        %s208 = smul.addr %s207, 8
        %s209 = scalar_lea.vmem %s0, %s208
        %s210 = smul.u32 %s23, 2
        %s211 = smul.u32 %s210, 24
        %s212 = scalar_lea.vmem %s209, %s211
        %v213 = vld [vmem:[%s212] sm:$0xff]
        %v214 = vld [vmem:[%s212 + $0x8] sm:$0xff]
        %v215 = vld [vmem:[%s212 + $0x10] sm:$0x3]
        %v216 = vld [vmem:[%s212 + $0x18] sm:$0xff]
        %v217 = vld [vmem:[%s212 + $0x20] sm:$0xff]
        %v218 = vld [vmem:[%s212 + $0x28] sm:$0x3]
        %v219 = vld [vmem:[%s212 + $0x30] sm:$0xff]
        %v220 = vld [vmem:[%s212 + $0x38] sm:$0xff]
        %v221 = vld [vmem:[%s212 + $0x40] sm:$0x3]
        %v222 = vld [vmem:[%s212 + $0x48] sm:$0xff]
        %v223 = vld [vmem:[%s212 + $0x50] sm:$0xff]
        %v224 = vld [vmem:[%s212 + $0x58] sm:$0x3]
        %v225 = vld [vmem:[%s2] sm:$0x1]
        %v226 = vld [vmem:[%s3] sm:$0x1]
        %v227 = vld [vmem:[%s1] sm:$0xf]
        %s228 = scalar_lea.vmem %s1, 4
        %v229 = vld [vmem:[%s228] sm:$0xf]
        %vm233 = vcmask 1046528
        %v234 = vrot.slane %v213, 1
        %v235 = vrot.slane %v214, 1
        %v236 = vsel %vm233, %v234, %v235
        %v237 = vrot.slane %v215, 1
        %v238 = vsel %vm233, %v235, %v237
        %vm239 = vcmask 31744
        %v240 = vsel %vm239, %v236, 0
        %v242 = vsel %vm239, %v238, 0
        %vm244 = vcmask 1043456
        %v246 = vsel %vm244, %v229, 0
        %248 = vmatprep.subr.mxu0 0.0
        %249 = vmatpush1.msra.mxu0 0.0
        %250 = vmatprep.subr.mxu0 0.0
        %251 = vmatpush1.msra.mxu0 0.0
        %252 = vmatprep.subr.mxu0 0.0
        %253 = vmatpush1.msra.mxu0 0.0
        %254 = vmatprep.subr.mxu0 0.0
        %255 = vmatpush1.msra.mxu0 0.0
        %256 = vmatprep.subr.mxu0 0.0
        %257 = vmatpush1.msra.mxu0 0.0
        %258 = vmatprep.subr.mxu0 0.0
        %259 = vmatpush1.msra.mxu0 0.0
        %260 = vmatprep.subr.mxu0 0.0
        %261 = vmatpush1.msra.mxu0 0.0
        %262 = vmatprep.subr.mxu0 0.0
        %263 = vmatpush1.msra.mxu0 0.0
        %264 = vmatprep.subr.mxu0 0.0
        %265 = vmatpush1.msra.mxu0 0.0
        %266 = vmatprep.subr.mxu0 0.0
        %267 = vmatpush1.msra.mxu0 0.0
        %268 = vmatprep.subr.mxu0 0.0
        %269 = vmatpush1.msra.mxu0 0.0
        %270 = vmatprep.subr.mxu0 0.0
        %271 = vmatpush1.msra.mxu0 0.0
        %272 = vmatprep.subr.mxu0 0.0
        %273 = vmatpush1.msra.mxu0 0.0
        %274 = vmatprep.subr.mxu0 0.0
        %275 = vmatpush1.msra.mxu0 0.0
        %276 = vmatprep.subr.mxu0 0.0
        %277 = vmatpush1.msra.mxu0 0.0
        %278 = vmatprep.subr.mxu0 0.0
        %279 = vmatpush1.msra.mxu0 %v246
        %280 = vmatprep.subr.mxu0 0.0
        %281 = vmatpush2.msra.mxu0 0.0
        %282 = vmatprep.subr.mxu0 0.0
        %283 = vmatpush2.msra.mxu0 0.0
        %284 = vmatprep.subr.mxu0 0.0
        %285 = vmatpush2.msra.mxu0 0.0
        %286 = vmatprep.subr.mxu0 0.0
        %287 = vmatpush2.msra.mxu0 0.0
        %288 = vmatprep.subr.mxu0 0.0
        %289 = vmatpush2.msra.mxu0 0.0
        %290 = vmatprep.subr.mxu0 0.0
        %291 = vmatpush2.msra.mxu0 0.0
        %292 = vmatprep.subr.mxu0 0.0
        %293 = vmatpush2.msra.mxu0 0.0
        %294 = vmatprep.subr.mxu0 0.0
        %295 = vmatpush2.msra.mxu0 0.0
        %296 = vmatprep.subr.mxu0 0.0
        %297 = vmatpush2.msra.mxu0 0.0
        %298 = vmatprep.subr.mxu0 0.0
        %299 = vmatpush2.msra.mxu0 0.0
        %300 = vmatprep.subr.mxu0 0.0
        %301 = vmatpush2.msra.mxu0 0.0
        %302 = vmatprep.subr.mxu0 0.0
        %303 = vmatpush2.msra.mxu0 0.0
        %304 = vmatprep.subr.mxu0 0.0
        %305 = vmatpush2.msra.mxu0 0.0
        %306 = vmatprep.subr.mxu0 0.0
        %307 = vmatpush2.msra.mxu0 0.0
        %308 = vmatprep.subr.mxu0 0.0
        %309 = vmatpush2.msra.mxu0 0.0
        %310 = vmatprep.subr.mxu0 0.0
        %311 = vmatpush2.msra.mxu0 0.0
        %312 = vmatprep.mubr.f32.mxu0 0.0
        %313 = vmatmul.mubr.f32.gmra.mxu0 %v240
        %v314 = vpop.f32.mrf.mxu0
        %v315 = vadd.f32 0.0, %v314
        %v316 = vpop.f32.mrf.mxu0
        %317 = vmatprep.mubr.f32.mxu0 0.0
        %318 = vmatmul.mubr.f32.gmra.mxu0 %v242
        %v319 = vpop.f32.mrf.mxu0
        %v320 = vadd.f32 0.0, %v319
        %v321 = vpop.f32.mrf.mxu0
        %322 = vdwg.mxu0
        %v323 = vsel %vm239, %v213, 0
        %v325 = vsel %vm239, %v214, 0
        %v328 = vsel %vm244, %v227, 0
        %330 = vmatprep.subr.mxu0 0.0
        %331 = vmatpush1.msra.mxu0 0.0
        %332 = vmatprep.subr.mxu0 0.0
        %333 = vmatpush1.msra.mxu0 0.0
        %334 = vmatprep.subr.mxu0 0.0
        %335 = vmatpush1.msra.mxu0 0.0
        %336 = vmatprep.subr.mxu0 0.0
        %337 = vmatpush1.msra.mxu0 0.0
        %338 = vmatprep.subr.mxu0 0.0
        %339 = vmatpush1.msra.mxu0 0.0
        %340 = vmatprep.subr.mxu0 0.0
        %341 = vmatpush1.msra.mxu0 0.0
        %342 = vmatprep.subr.mxu0 0.0
        %343 = vmatpush1.msra.mxu0 0.0
        %344 = vmatprep.subr.mxu0 0.0
        %345 = vmatpush1.msra.mxu0 0.0
        %346 = vmatprep.subr.mxu0 0.0
        %347 = vmatpush1.msra.mxu0 0.0
        %348 = vmatprep.subr.mxu0 0.0
        %349 = vmatpush1.msra.mxu0 0.0
        %350 = vmatprep.subr.mxu0 0.0
        %351 = vmatpush1.msra.mxu0 0.0
        %352 = vmatprep.subr.mxu0 0.0
        %353 = vmatpush1.msra.mxu0 0.0
        %354 = vmatprep.subr.mxu0 0.0
        %355 = vmatpush1.msra.mxu0 0.0
        %356 = vmatprep.subr.mxu0 0.0
        %357 = vmatpush1.msra.mxu0 0.0
        %358 = vmatprep.subr.mxu0 0.0
        %359 = vmatpush1.msra.mxu0 0.0
        %360 = vmatprep.subr.mxu0 0.0
        %361 = vmatpush1.msra.mxu0 %v328
        %362 = vmatprep.subr.mxu0 0.0
        %363 = vmatpush2.msra.mxu0 0.0
        %364 = vmatprep.subr.mxu0 0.0
        %365 = vmatpush2.msra.mxu0 0.0
        %366 = vmatprep.subr.mxu0 0.0
        %367 = vmatpush2.msra.mxu0 0.0
        %368 = vmatprep.subr.mxu0 0.0
        %369 = vmatpush2.msra.mxu0 0.0
        %370 = vmatprep.subr.mxu0 0.0
        %371 = vmatpush2.msra.mxu0 0.0
        %372 = vmatprep.subr.mxu0 0.0
        %373 = vmatpush2.msra.mxu0 0.0
        %374 = vmatprep.subr.mxu0 0.0
        %375 = vmatpush2.msra.mxu0 0.0
        %376 = vmatprep.subr.mxu0 0.0
        %377 = vmatpush2.msra.mxu0 0.0
        %378 = vmatprep.subr.mxu0 0.0
        %379 = vmatpush2.msra.mxu0 0.0
        %380 = vmatprep.subr.mxu0 0.0
        %381 = vmatpush2.msra.mxu0 0.0
        %382 = vmatprep.subr.mxu0 0.0
        %383 = vmatpush2.msra.mxu0 0.0
        %384 = vmatprep.subr.mxu0 0.0
        %385 = vmatpush2.msra.mxu0 0.0
        %386 = vmatprep.subr.mxu0 0.0
        %387 = vmatpush2.msra.mxu0 0.0
        %388 = vmatprep.subr.mxu0 0.0
        %389 = vmatpush2.msra.mxu0 0.0
        %390 = vmatprep.subr.mxu0 0.0
        %391 = vmatpush2.msra.mxu0 0.0
        %392 = vmatprep.subr.mxu0 0.0
        %393 = vmatpush2.msra.mxu0 0.0
        %394 = vmatprep.mubr.f32.mxu0 0.0
        %395 = vmatmul.mubr.f32.gmra.mxu0 %v323
        %v396 = vpop.f32.mrf.mxu0
        %v397 = vadd.f32 %v315, %v396
        %v398 = vpop.f32.mrf.mxu0
        %399 = vmatprep.mubr.f32.mxu0 0.0
        %400 = vmatmul.mubr.f32.gmra.mxu0 %v325
        %v401 = vpop.f32.mrf.mxu0
        %v402 = vadd.f32 %v320, %v401
        %v403 = vpop.f32.mrf.mxu0
        %404 = vdwg.mxu0
        %s405 = scalar_lea.vmem %s1, 8
        %v406 = vld [vmem:[%s405] sm:$0xf]
        %vm407 = vcmask 1045504
        %v408 = vrot.slane %v213, 2
        %v409 = vrot.slane %v214, 2
        %v410 = vsel %vm407, %v408, %v409
        %v411 = vrot.slane %v215, 2
        %v412 = vsel %vm407, %v409, %v411
        %v413 = vsel %vm239, %v410, 0
        %v415 = vsel %vm239, %v412, 0
        %v418 = vsel %vm244, %v406, 0
        %420 = vmatprep.subr.mxu0 0.0
        %421 = vmatpush1.msra.mxu0 0.0
        %422 = vmatprep.subr.mxu0 0.0
        %423 = vmatpush1.msra.mxu0 0.0
        %424 = vmatprep.subr.mxu0 0.0
        %425 = vmatpush1.msra.mxu0 0.0
        %426 = vmatprep.subr.mxu0 0.0
        %427 = vmatpush1.msra.mxu0 0.0
        %428 = vmatprep.subr.mxu0 0.0
        %429 = vmatpush1.msra.mxu0 0.0
        %430 = vmatprep.subr.mxu0 0.0
        %431 = vmatpush1.msra.mxu0 0.0
        %432 = vmatprep.subr.mxu0 0.0
        %433 = vmatpush1.msra.mxu0 0.0
        %434 = vmatprep.subr.mxu0 0.0
        %435 = vmatpush1.msra.mxu0 0.0
        %436 = vmatprep.subr.mxu0 0.0
        %437 = vmatpush1.msra.mxu0 0.0
        %438 = vmatprep.subr.mxu0 0.0
        %439 = vmatpush1.msra.mxu0 0.0
        %440 = vmatprep.subr.mxu0 0.0
        %441 = vmatpush1.msra.mxu0 0.0
        %442 = vmatprep.subr.mxu0 0.0
        %443 = vmatpush1.msra.mxu0 0.0
        %444 = vmatprep.subr.mxu0 0.0
        %445 = vmatpush1.msra.mxu0 0.0
        %446 = vmatprep.subr.mxu0 0.0
        %447 = vmatpush1.msra.mxu0 0.0
        %448 = vmatprep.subr.mxu0 0.0
        %449 = vmatpush1.msra.mxu0 0.0
        %450 = vmatprep.subr.mxu0 0.0
        %451 = vmatpush1.msra.mxu0 %v418
        %452 = vmatprep.subr.mxu0 0.0
        %453 = vmatpush2.msra.mxu0 0.0
        %454 = vmatprep.subr.mxu0 0.0
        %455 = vmatpush2.msra.mxu0 0.0
        %456 = vmatprep.subr.mxu0 0.0
        %457 = vmatpush2.msra.mxu0 0.0
        %458 = vmatprep.subr.mxu0 0.0
        %459 = vmatpush2.msra.mxu0 0.0
        %460 = vmatprep.subr.mxu0 0.0
        %461 = vmatpush2.msra.mxu0 0.0
        %462 = vmatprep.subr.mxu0 0.0
        %463 = vmatpush2.msra.mxu0 0.0
        %464 = vmatprep.subr.mxu0 0.0
        %465 = vmatpush2.msra.mxu0 0.0
        %466 = vmatprep.subr.mxu0 0.0
        %467 = vmatpush2.msra.mxu0 0.0
        %468 = vmatprep.subr.mxu0 0.0
        %469 = vmatpush2.msra.mxu0 0.0
        %470 = vmatprep.subr.mxu0 0.0
        %471 = vmatpush2.msra.mxu0 0.0
        %472 = vmatprep.subr.mxu0 0.0
        %473 = vmatpush2.msra.mxu0 0.0
        %474 = vmatprep.subr.mxu0 0.0
        %475 = vmatpush2.msra.mxu0 0.0
        %476 = vmatprep.subr.mxu0 0.0
        %477 = vmatpush2.msra.mxu0 0.0
        %478 = vmatprep.subr.mxu0 0.0
        %479 = vmatpush2.msra.mxu0 0.0
        %480 = vmatprep.subr.mxu0 0.0
        %481 = vmatpush2.msra.mxu0 0.0
        %482 = vmatprep.subr.mxu0 0.0
        %483 = vmatpush2.msra.mxu0 0.0
        %484 = vmatprep.mubr.f32.mxu0 0.0
        %485 = vmatmul.mubr.f32.gmra.mxu0 %v413
        %v486 = vpop.f32.mrf.mxu0
        %v487 = vadd.f32 0.0, %v486
        %v488 = vpop.f32.mrf.mxu0
        %489 = vmatprep.mubr.f32.mxu0 0.0
        %490 = vmatmul.mubr.f32.gmra.mxu0 %v415
        %v491 = vpop.f32.mrf.mxu0
        %v492 = vadd.f32 0.0, %v491
        %v493 = vpop.f32.mrf.mxu0
        %494 = vdwg.mxu0
        %v495 = vadd.f32 %v397, %v487
        %v496 = vadd.f32 %v402, %v492
        %s497 = scalar_lea.vmem %s1, 12
        %v498 = vld [vmem:[%s497] sm:$0xf]
        %v500 = vsel %vm239, %v216, 0
        %v503 = vsel %vm239, %v217, 0
        %v506 = vsel %vm244, %v498, 0
        %508 = vmatprep.subr.mxu0 0.0
        %509 = vmatpush1.msra.mxu0 0.0
        %510 = vmatprep.subr.mxu0 0.0
        %511 = vmatpush1.msra.mxu0 0.0
        %512 = vmatprep.subr.mxu0 0.0
        %513 = vmatpush1.msra.mxu0 0.0
        %514 = vmatprep.subr.mxu0 0.0
        %515 = vmatpush1.msra.mxu0 0.0
        %516 = vmatprep.subr.mxu0 0.0
        %517 = vmatpush1.msra.mxu0 0.0
        %518 = vmatprep.subr.mxu0 0.0
        %519 = vmatpush1.msra.mxu0 0.0
        %520 = vmatprep.subr.mxu0 0.0
        %521 = vmatpush1.msra.mxu0 0.0
        %522 = vmatprep.subr.mxu0 0.0
        %523 = vmatpush1.msra.mxu0 0.0
        %524 = vmatprep.subr.mxu0 0.0
        %525 = vmatpush1.msra.mxu0 0.0
        %526 = vmatprep.subr.mxu0 0.0
        %527 = vmatpush1.msra.mxu0 0.0
        %528 = vmatprep.subr.mxu0 0.0
        %529 = vmatpush1.msra.mxu0 0.0
        %530 = vmatprep.subr.mxu0 0.0
        %531 = vmatpush1.msra.mxu0 0.0
        %532 = vmatprep.subr.mxu0 0.0
        %533 = vmatpush1.msra.mxu0 0.0
        %534 = vmatprep.subr.mxu0 0.0
        %535 = vmatpush1.msra.mxu0 0.0
        %536 = vmatprep.subr.mxu0 0.0
        %537 = vmatpush1.msra.mxu0 0.0
        %538 = vmatprep.subr.mxu0 0.0
        %539 = vmatpush1.msra.mxu0 %v506
        %540 = vmatprep.subr.mxu0 0.0
        %541 = vmatpush2.msra.mxu0 0.0
        %542 = vmatprep.subr.mxu0 0.0
        %543 = vmatpush2.msra.mxu0 0.0
        %544 = vmatprep.subr.mxu0 0.0
        %545 = vmatpush2.msra.mxu0 0.0
        %546 = vmatprep.subr.mxu0 0.0
        %547 = vmatpush2.msra.mxu0 0.0
        %548 = vmatprep.subr.mxu0 0.0
        %549 = vmatpush2.msra.mxu0 0.0
        %550 = vmatprep.subr.mxu0 0.0
        %551 = vmatpush2.msra.mxu0 0.0
        %552 = vmatprep.subr.mxu0 0.0
        %553 = vmatpush2.msra.mxu0 0.0
        %554 = vmatprep.subr.mxu0 0.0
        %555 = vmatpush2.msra.mxu0 0.0
        %556 = vmatprep.subr.mxu0 0.0
        %557 = vmatpush2.msra.mxu0 0.0
        %558 = vmatprep.subr.mxu0 0.0
        %559 = vmatpush2.msra.mxu0 0.0
        %560 = vmatprep.subr.mxu0 0.0
        %561 = vmatpush2.msra.mxu0 0.0
        %562 = vmatprep.subr.mxu0 0.0
        %563 = vmatpush2.msra.mxu0 0.0
        %564 = vmatprep.subr.mxu0 0.0
        %565 = vmatpush2.msra.mxu0 0.0
        %566 = vmatprep.subr.mxu0 0.0
        %567 = vmatpush2.msra.mxu0 0.0
        %568 = vmatprep.subr.mxu0 0.0
        %569 = vmatpush2.msra.mxu0 0.0
        %570 = vmatprep.subr.mxu0 0.0
        %571 = vmatpush2.msra.mxu0 0.0
        %572 = vmatprep.mubr.f32.mxu0 0.0
        %573 = vmatmul.mubr.f32.gmra.mxu0 %v500
        %v574 = vpop.f32.mrf.mxu0
        %v575 = vadd.f32 0.0, %v574
        %v576 = vpop.f32.mrf.mxu0
        %577 = vmatprep.mubr.f32.mxu0 0.0
        %578 = vmatmul.mubr.f32.gmra.mxu0 %v503
        %v579 = vpop.f32.mrf.mxu0
        %v580 = vadd.f32 0.0, %v579
        %v581 = vpop.f32.mrf.mxu0
        %582 = vdwg.mxu0
        %v583 = vadd.f32 %v495, %v575
        %v584 = vadd.f32 %v496, %v580
        %s585 = scalar_lea.vmem %s1, 16
        %v586 = vld [vmem:[%s585] sm:$0xf]
        %v588 = vrot.slane %v216, 1
        %v589 = vrot.slane %v217, 1
        %v590 = vsel %vm233, %v588, %v589
        %v591 = vrot.slane %v218, 1
        %v592 = vsel %vm233, %v589, %v591
        %v593 = vsel %vm239, %v590, 0
        %v595 = vsel %vm239, %v592, 0
        %v598 = vsel %vm244, %v586, 0
        %600 = vmatprep.subr.mxu0 0.0
        %601 = vmatpush1.msra.mxu0 0.0
        %602 = vmatprep.subr.mxu0 0.0
        %603 = vmatpush1.msra.mxu0 0.0
        %604 = vmatprep.subr.mxu0 0.0
        %605 = vmatpush1.msra.mxu0 0.0
        %606 = vmatprep.subr.mxu0 0.0
        %607 = vmatpush1.msra.mxu0 0.0
        %608 = vmatprep.subr.mxu0 0.0
        %609 = vmatpush1.msra.mxu0 0.0
        %610 = vmatprep.subr.mxu0 0.0
        %611 = vmatpush1.msra.mxu0 0.0
        %612 = vmatprep.subr.mxu0 0.0
        %613 = vmatpush1.msra.mxu0 0.0
        %614 = vmatprep.subr.mxu0 0.0
        %615 = vmatpush1.msra.mxu0 0.0
        %616 = vmatprep.subr.mxu0 0.0
        %617 = vmatpush1.msra.mxu0 0.0
        %618 = vmatprep.subr.mxu0 0.0
        %619 = vmatpush1.msra.mxu0 0.0
        %620 = vmatprep.subr.mxu0 0.0
        %621 = vmatpush1.msra.mxu0 0.0
        %622 = vmatprep.subr.mxu0 0.0
        %623 = vmatpush1.msra.mxu0 0.0
        %624 = vmatprep.subr.mxu0 0.0
        %625 = vmatpush1.msra.mxu0 0.0
        %626 = vmatprep.subr.mxu0 0.0
        %627 = vmatpush1.msra.mxu0 0.0
        %628 = vmatprep.subr.mxu0 0.0
        %629 = vmatpush1.msra.mxu0 0.0
        %630 = vmatprep.subr.mxu0 0.0
        %631 = vmatpush1.msra.mxu0 %v598
        %632 = vmatprep.subr.mxu0 0.0
        %633 = vmatpush2.msra.mxu0 0.0
        %634 = vmatprep.subr.mxu0 0.0
        %635 = vmatpush2.msra.mxu0 0.0
        %636 = vmatprep.subr.mxu0 0.0
        %637 = vmatpush2.msra.mxu0 0.0
        %638 = vmatprep.subr.mxu0 0.0
        %639 = vmatpush2.msra.mxu0 0.0
        %640 = vmatprep.subr.mxu0 0.0
        %641 = vmatpush2.msra.mxu0 0.0
        %642 = vmatprep.subr.mxu0 0.0
        %643 = vmatpush2.msra.mxu0 0.0
        %644 = vmatprep.subr.mxu0 0.0
        %645 = vmatpush2.msra.mxu0 0.0
        %646 = vmatprep.subr.mxu0 0.0
        %647 = vmatpush2.msra.mxu0 0.0
        %648 = vmatprep.subr.mxu0 0.0
        %649 = vmatpush2.msra.mxu0 0.0
        %650 = vmatprep.subr.mxu0 0.0
        %651 = vmatpush2.msra.mxu0 0.0
        %652 = vmatprep.subr.mxu0 0.0
        %653 = vmatpush2.msra.mxu0 0.0
        %654 = vmatprep.subr.mxu0 0.0
        %655 = vmatpush2.msra.mxu0 0.0
        %656 = vmatprep.subr.mxu0 0.0
        %657 = vmatpush2.msra.mxu0 0.0
        %658 = vmatprep.subr.mxu0 0.0
        %659 = vmatpush2.msra.mxu0 0.0
        %660 = vmatprep.subr.mxu0 0.0
        %661 = vmatpush2.msra.mxu0 0.0
        %662 = vmatprep.subr.mxu0 0.0
        %663 = vmatpush2.msra.mxu0 0.0
        %664 = vmatprep.mubr.f32.mxu0 0.0
        %665 = vmatmul.mubr.f32.gmra.mxu0 %v593
        %v666 = vpop.f32.mrf.mxu0
        %v667 = vadd.f32 0.0, %v666
        %v668 = vpop.f32.mrf.mxu0
        %669 = vmatprep.mubr.f32.mxu0 0.0
        %670 = vmatmul.mubr.f32.gmra.mxu0 %v595
        %v671 = vpop.f32.mrf.mxu0
        %v672 = vadd.f32 0.0, %v671
        %v673 = vpop.f32.mrf.mxu0
        %674 = vdwg.mxu0
        %v675 = vadd.f32 %v583, %v667
        %v676 = vadd.f32 %v584, %v672
        %s677 = scalar_lea.vmem %s1, 20
        %v678 = vld [vmem:[%s677] sm:$0xf]
        %v679 = vrot.slane %v216, 2
        %v680 = vrot.slane %v217, 2
        %v681 = vsel %vm407, %v679, %v680
        %v682 = vrot.slane %v218, 2
        %v683 = vsel %vm407, %v680, %v682
        %v684 = vsel %vm239, %v681, 0
        %v686 = vsel %vm239, %v683, 0
        %v689 = vsel %vm244, %v678, 0
        %691 = vmatprep.subr.mxu0 0.0
        %692 = vmatpush1.msra.mxu0 0.0
        %693 = vmatprep.subr.mxu0 0.0
        %694 = vmatpush1.msra.mxu0 0.0
        %695 = vmatprep.subr.mxu0 0.0
        %696 = vmatpush1.msra.mxu0 0.0
        %697 = vmatprep.subr.mxu0 0.0
        %698 = vmatpush1.msra.mxu0 0.0
        %699 = vmatprep.subr.mxu0 0.0
        %700 = vmatpush1.msra.mxu0 0.0
        %701 = vmatprep.subr.mxu0 0.0
        %702 = vmatpush1.msra.mxu0 0.0
        %703 = vmatprep.subr.mxu0 0.0
        %704 = vmatpush1.msra.mxu0 0.0
        %705 = vmatprep.subr.mxu0 0.0
        %706 = vmatpush1.msra.mxu0 0.0
        %707 = vmatprep.subr.mxu0 0.0
        %708 = vmatpush1.msra.mxu0 0.0
        %709 = vmatprep.subr.mxu0 0.0
        %710 = vmatpush1.msra.mxu0 0.0
        %711 = vmatprep.subr.mxu0 0.0
        %712 = vmatpush1.msra.mxu0 0.0
        %713 = vmatprep.subr.mxu0 0.0
        %714 = vmatpush1.msra.mxu0 0.0
        %715 = vmatprep.subr.mxu0 0.0
        %716 = vmatpush1.msra.mxu0 0.0
        %717 = vmatprep.subr.mxu0 0.0
        %718 = vmatpush1.msra.mxu0 0.0
        %719 = vmatprep.subr.mxu0 0.0
        %720 = vmatpush1.msra.mxu0 0.0
        %721 = vmatprep.subr.mxu0 0.0
        %722 = vmatpush1.msra.mxu0 %v689
        %723 = vmatprep.subr.mxu0 0.0
        %724 = vmatpush2.msra.mxu0 0.0
        %725 = vmatprep.subr.mxu0 0.0
        %726 = vmatpush2.msra.mxu0 0.0
        %727 = vmatprep.subr.mxu0 0.0
        %728 = vmatpush2.msra.mxu0 0.0
        %729 = vmatprep.subr.mxu0 0.0
        %730 = vmatpush2.msra.mxu0 0.0
        %731 = vmatprep.subr.mxu0 0.0
        %732 = vmatpush2.msra.mxu0 0.0
        %733 = vmatprep.subr.mxu0 0.0
        %734 = vmatpush2.msra.mxu0 0.0
        %735 = vmatprep.subr.mxu0 0.0
        %736 = vmatpush2.msra.mxu0 0.0
        %737 = vmatprep.subr.mxu0 0.0
        %738 = vmatpush2.msra.mxu0 0.0
        %739 = vmatprep.subr.mxu0 0.0
        %740 = vmatpush2.msra.mxu0 0.0
        %741 = vmatprep.subr.mxu0 0.0
        %742 = vmatpush2.msra.mxu0 0.0
        %743 = vmatprep.subr.mxu0 0.0
        %744 = vmatpush2.msra.mxu0 0.0
        %745 = vmatprep.subr.mxu0 0.0
        %746 = vmatpush2.msra.mxu0 0.0
        %747 = vmatprep.subr.mxu0 0.0
        %748 = vmatpush2.msra.mxu0 0.0
        %749 = vmatprep.subr.mxu0 0.0
        %750 = vmatpush2.msra.mxu0 0.0
        %751 = vmatprep.subr.mxu0 0.0
        %752 = vmatpush2.msra.mxu0 0.0
        %753 = vmatprep.subr.mxu0 0.0
        %754 = vmatpush2.msra.mxu0 0.0
        %755 = vmatprep.mubr.f32.mxu0 0.0
        %756 = vmatmul.mubr.f32.gmra.mxu0 %v684
        %v757 = vpop.f32.mrf.mxu0
        %v758 = vadd.f32 0.0, %v757
        %v759 = vpop.f32.mrf.mxu0
        %760 = vmatprep.mubr.f32.mxu0 0.0
        %761 = vmatmul.mubr.f32.gmra.mxu0 %v686
        %v762 = vpop.f32.mrf.mxu0
        %v763 = vadd.f32 0.0, %v762
        %v764 = vpop.f32.mrf.mxu0
        %765 = vdwg.mxu0
        %v766 = vadd.f32 %v675, %v758
        %v767 = vadd.f32 %v676, %v763
        %s768 = scalar_lea.vmem %s1, 24
        %v769 = vld [vmem:[%s768] sm:$0xf]
        %v771 = vsel %vm239, %v219, 0
        %v774 = vsel %vm239, %v220, 0
        %v777 = vsel %vm244, %v769, 0
        %779 = vmatprep.subr.mxu0 0.0
        %780 = vmatpush1.msra.mxu0 0.0
        %781 = vmatprep.subr.mxu0 0.0
        %782 = vmatpush1.msra.mxu0 0.0
        %783 = vmatprep.subr.mxu0 0.0
        %784 = vmatpush1.msra.mxu0 0.0
        %785 = vmatprep.subr.mxu0 0.0
        %786 = vmatpush1.msra.mxu0 0.0
        %787 = vmatprep.subr.mxu0 0.0
        %788 = vmatpush1.msra.mxu0 0.0
        %789 = vmatprep.subr.mxu0 0.0
        %790 = vmatpush1.msra.mxu0 0.0
        %791 = vmatprep.subr.mxu0 0.0
        %792 = vmatpush1.msra.mxu0 0.0
        %793 = vmatprep.subr.mxu0 0.0
        %794 = vmatpush1.msra.mxu0 0.0
        %795 = vmatprep.subr.mxu0 0.0
        %796 = vmatpush1.msra.mxu0 0.0
        %797 = vmatprep.subr.mxu0 0.0
        %798 = vmatpush1.msra.mxu0 0.0
        %799 = vmatprep.subr.mxu0 0.0
        %800 = vmatpush1.msra.mxu0 0.0
        %801 = vmatprep.subr.mxu0 0.0
        %802 = vmatpush1.msra.mxu0 0.0
        %803 = vmatprep.subr.mxu0 0.0
        %804 = vmatpush1.msra.mxu0 0.0
        %805 = vmatprep.subr.mxu0 0.0
        %806 = vmatpush1.msra.mxu0 0.0
        %807 = vmatprep.subr.mxu0 0.0
        %808 = vmatpush1.msra.mxu0 0.0
        %809 = vmatprep.subr.mxu0 0.0
        %810 = vmatpush1.msra.mxu0 %v777
        %811 = vmatprep.subr.mxu0 0.0
        %812 = vmatpush2.msra.mxu0 0.0
        %813 = vmatprep.subr.mxu0 0.0
        %814 = vmatpush2.msra.mxu0 0.0
        %815 = vmatprep.subr.mxu0 0.0
        %816 = vmatpush2.msra.mxu0 0.0
        %817 = vmatprep.subr.mxu0 0.0
        %818 = vmatpush2.msra.mxu0 0.0
        %819 = vmatprep.subr.mxu0 0.0
        %820 = vmatpush2.msra.mxu0 0.0
        %821 = vmatprep.subr.mxu0 0.0
        %822 = vmatpush2.msra.mxu0 0.0
        %823 = vmatprep.subr.mxu0 0.0
        %824 = vmatpush2.msra.mxu0 0.0
        %825 = vmatprep.subr.mxu0 0.0
        %826 = vmatpush2.msra.mxu0 0.0
        %827 = vmatprep.subr.mxu0 0.0
        %828 = vmatpush2.msra.mxu0 0.0
        %829 = vmatprep.subr.mxu0 0.0
        %830 = vmatpush2.msra.mxu0 0.0
        %831 = vmatprep.subr.mxu0 0.0
        %832 = vmatpush2.msra.mxu0 0.0
        %833 = vmatprep.subr.mxu0 0.0
        %834 = vmatpush2.msra.mxu0 0.0
        %835 = vmatprep.subr.mxu0 0.0
        %836 = vmatpush2.msra.mxu0 0.0
        %837 = vmatprep.subr.mxu0 0.0
        %838 = vmatpush2.msra.mxu0 0.0
        %839 = vmatprep.subr.mxu0 0.0
        %840 = vmatpush2.msra.mxu0 0.0
        %841 = vmatprep.subr.mxu0 0.0
        %842 = vmatpush2.msra.mxu0 0.0
        %843 = vmatprep.mubr.f32.mxu0 0.0
        %844 = vmatmul.mubr.f32.gmra.mxu0 %v771
        %v845 = vpop.f32.mrf.mxu0
        %v846 = vadd.f32 0.0, %v845
        %v847 = vpop.f32.mrf.mxu0
        %848 = vmatprep.mubr.f32.mxu0 0.0
        %849 = vmatmul.mubr.f32.gmra.mxu0 %v774
        %v850 = vpop.f32.mrf.mxu0
        %v851 = vadd.f32 0.0, %v850
        %v852 = vpop.f32.mrf.mxu0
        %853 = vdwg.mxu0
        %v854 = vadd.f32 %v766, %v846
        %v855 = vadd.f32 %v767, %v851
        %s856 = scalar_lea.vmem %s1, 28
        %v857 = vld [vmem:[%s856] sm:$0xf]
        %v859 = vrot.slane %v219, 1
        %v860 = vrot.slane %v220, 1
        %v861 = vsel %vm233, %v859, %v860
        %v862 = vrot.slane %v221, 1
        %v863 = vsel %vm233, %v860, %v862
        %v864 = vsel %vm239, %v861, 0
        %v866 = vsel %vm239, %v863, 0
        %v869 = vsel %vm244, %v857, 0
        %871 = vmatprep.subr.mxu0 0.0
        %872 = vmatpush1.msra.mxu0 0.0
        %873 = vmatprep.subr.mxu0 0.0
        %874 = vmatpush1.msra.mxu0 0.0
        %875 = vmatprep.subr.mxu0 0.0
        %876 = vmatpush1.msra.mxu0 0.0
        %877 = vmatprep.subr.mxu0 0.0
        %878 = vmatpush1.msra.mxu0 0.0
        %879 = vmatprep.subr.mxu0 0.0
        %880 = vmatpush1.msra.mxu0 0.0
        %881 = vmatprep.subr.mxu0 0.0
        %882 = vmatpush1.msra.mxu0 0.0
        %883 = vmatprep.subr.mxu0 0.0
        %884 = vmatpush1.msra.mxu0 0.0
        %885 = vmatprep.subr.mxu0 0.0
        %886 = vmatpush1.msra.mxu0 0.0
        %887 = vmatprep.subr.mxu0 0.0
        %888 = vmatpush1.msra.mxu0 0.0
        %889 = vmatprep.subr.mxu0 0.0
        %890 = vmatpush1.msra.mxu0 0.0
        %891 = vmatprep.subr.mxu0 0.0
        %892 = vmatpush1.msra.mxu0 0.0
        %893 = vmatprep.subr.mxu0 0.0
        %894 = vmatpush1.msra.mxu0 0.0
        %895 = vmatprep.subr.mxu0 0.0
        %896 = vmatpush1.msra.mxu0 0.0
        %897 = vmatprep.subr.mxu0 0.0
        %898 = vmatpush1.msra.mxu0 0.0
        %899 = vmatprep.subr.mxu0 0.0
        %900 = vmatpush1.msra.mxu0 0.0
        %901 = vmatprep.subr.mxu0 0.0
        %902 = vmatpush1.msra.mxu0 %v869
        %903 = vmatprep.subr.mxu0 0.0
        %904 = vmatpush2.msra.mxu0 0.0
        %905 = vmatprep.subr.mxu0 0.0
        %906 = vmatpush2.msra.mxu0 0.0
        %907 = vmatprep.subr.mxu0 0.0
        %908 = vmatpush2.msra.mxu0 0.0
        %909 = vmatprep.subr.mxu0 0.0
        %910 = vmatpush2.msra.mxu0 0.0
        %911 = vmatprep.subr.mxu0 0.0
        %912 = vmatpush2.msra.mxu0 0.0
        %913 = vmatprep.subr.mxu0 0.0
        %914 = vmatpush2.msra.mxu0 0.0
        %915 = vmatprep.subr.mxu0 0.0
        %916 = vmatpush2.msra.mxu0 0.0
        %917 = vmatprep.subr.mxu0 0.0
        %918 = vmatpush2.msra.mxu0 0.0
        %919 = vmatprep.subr.mxu0 0.0
        %920 = vmatpush2.msra.mxu0 0.0
        %921 = vmatprep.subr.mxu0 0.0
        %922 = vmatpush2.msra.mxu0 0.0
        %923 = vmatprep.subr.mxu0 0.0
        %924 = vmatpush2.msra.mxu0 0.0
        %925 = vmatprep.subr.mxu0 0.0
        %926 = vmatpush2.msra.mxu0 0.0
        %927 = vmatprep.subr.mxu0 0.0
        %928 = vmatpush2.msra.mxu0 0.0
        %929 = vmatprep.subr.mxu0 0.0
        %930 = vmatpush2.msra.mxu0 0.0
        %931 = vmatprep.subr.mxu0 0.0
        %932 = vmatpush2.msra.mxu0 0.0
        %933 = vmatprep.subr.mxu0 0.0
        %934 = vmatpush2.msra.mxu0 0.0
        %935 = vmatprep.mubr.f32.mxu0 0.0
        %936 = vmatmul.mubr.f32.gmra.mxu0 %v864
        %v937 = vpop.f32.mrf.mxu0
        %v938 = vadd.f32 0.0, %v937
        %v939 = vpop.f32.mrf.mxu0
        %940 = vmatprep.mubr.f32.mxu0 0.0
        %941 = vmatmul.mubr.f32.gmra.mxu0 %v866
        %v942 = vpop.f32.mrf.mxu0
        %v943 = vadd.f32 0.0, %v942
        %v944 = vpop.f32.mrf.mxu0
        %945 = vdwg.mxu0
        %v946 = vadd.f32 %v854, %v938
        %v947 = vadd.f32 %v855, %v943
        %s948 = scalar_lea.vmem %s1, 32
        %v949 = vld [vmem:[%s948] sm:$0xf]
        %v950 = vrot.slane %v219, 2
        %v951 = vrot.slane %v220, 2
        %v952 = vsel %vm407, %v950, %v951
        %v953 = vrot.slane %v221, 2
        %v954 = vsel %vm407, %v951, %v953
        %v955 = vsel %vm239, %v952, 0
        %v957 = vsel %vm239, %v954, 0
        %v960 = vsel %vm244, %v949, 0
        %962 = vmatprep.subr.mxu0 0.0
        %963 = vmatpush1.msra.mxu0 0.0
        %964 = vmatprep.subr.mxu0 0.0
        %965 = vmatpush1.msra.mxu0 0.0
        %966 = vmatprep.subr.mxu0 0.0
        %967 = vmatpush1.msra.mxu0 0.0
        %968 = vmatprep.subr.mxu0 0.0
        %969 = vmatpush1.msra.mxu0 0.0
        %970 = vmatprep.subr.mxu0 0.0
        %971 = vmatpush1.msra.mxu0 0.0
        %972 = vmatprep.subr.mxu0 0.0
        %973 = vmatpush1.msra.mxu0 0.0
        %974 = vmatprep.subr.mxu0 0.0
        %975 = vmatpush1.msra.mxu0 0.0
        %976 = vmatprep.subr.mxu0 0.0
        %977 = vmatpush1.msra.mxu0 0.0
        %978 = vmatprep.subr.mxu0 0.0
        %979 = vmatpush1.msra.mxu0 0.0
        %980 = vmatprep.subr.mxu0 0.0
        %981 = vmatpush1.msra.mxu0 0.0
        %982 = vmatprep.subr.mxu0 0.0
        %983 = vmatpush1.msra.mxu0 0.0
        %984 = vmatprep.subr.mxu0 0.0
        %985 = vmatpush1.msra.mxu0 0.0
        %986 = vmatprep.subr.mxu0 0.0
        %987 = vmatpush1.msra.mxu0 0.0
        %988 = vmatprep.subr.mxu0 0.0
        %989 = vmatpush1.msra.mxu0 0.0
        %990 = vmatprep.subr.mxu0 0.0
        %991 = vmatpush1.msra.mxu0 0.0
        %992 = vmatprep.subr.mxu0 0.0
        %993 = vmatpush1.msra.mxu0 %v960
        %994 = vmatprep.subr.mxu0 0.0
        %995 = vmatpush2.msra.mxu0 0.0
        %996 = vmatprep.subr.mxu0 0.0
        %997 = vmatpush2.msra.mxu0 0.0
        %998 = vmatprep.subr.mxu0 0.0
        %999 = vmatpush2.msra.mxu0 0.0
        %1000 = vmatprep.subr.mxu0 0.0
        %1001 = vmatpush2.msra.mxu0 0.0
        %1002 = vmatprep.subr.mxu0 0.0
        %1003 = vmatpush2.msra.mxu0 0.0
        %1004 = vmatprep.subr.mxu0 0.0
        %1005 = vmatpush2.msra.mxu0 0.0
        %1006 = vmatprep.subr.mxu0 0.0
        %1007 = vmatpush2.msra.mxu0 0.0
        %1008 = vmatprep.subr.mxu0 0.0
        %1009 = vmatpush2.msra.mxu0 0.0
        %1010 = vmatprep.subr.mxu0 0.0
        %1011 = vmatpush2.msra.mxu0 0.0
        %1012 = vmatprep.subr.mxu0 0.0
        %1013 = vmatpush2.msra.mxu0 0.0
        %1014 = vmatprep.subr.mxu0 0.0
        %1015 = vmatpush2.msra.mxu0 0.0
        %1016 = vmatprep.subr.mxu0 0.0
        %1017 = vmatpush2.msra.mxu0 0.0
        %1018 = vmatprep.subr.mxu0 0.0
        %1019 = vmatpush2.msra.mxu0 0.0
        %1020 = vmatprep.subr.mxu0 0.0
        %1021 = vmatpush2.msra.mxu0 0.0
        %1022 = vmatprep.subr.mxu0 0.0
        %1023 = vmatpush2.msra.mxu0 0.0
        %1024 = vmatprep.subr.mxu0 0.0
        %1025 = vmatpush2.msra.mxu0 0.0
        %1026 = vmatprep.mubr.f32.mxu0 0.0
        %1027 = vmatmul.mubr.f32.gmra.mxu0 %v955
        %v1028 = vpop.f32.mrf.mxu0
        %v1029 = vadd.f32 0.0, %v1028
        %v1030 = vpop.f32.mrf.mxu0
        %1031 = vmatprep.mubr.f32.mxu0 0.0
        %1032 = vmatmul.mubr.f32.gmra.mxu0 %v957
        %v1033 = vpop.f32.mrf.mxu0
        %v1034 = vadd.f32 0.0, %v1033
        %v1035 = vpop.f32.mrf.mxu0
        %1036 = vdwg.mxu0
        %v1037 = vadd.f32 %v946, %v1029
        %v1038 = vadd.f32 %v947, %v1034
        %vm1039 = vcmp.gt.f32.partialorder %v1037, 0.0
        %vm1040 = vcmp.gt.f32.partialorder %v1038, 0.0
        %v1041 = vmul.f32 %v1037, 0.01
        %v1042 = vmul.f32 %v1038, 0.01
        %v1043 = vsel %vm1039, %v1037, %v1041
        %v1044 = vsel %vm1040, %v1038, %v1042
        %v1046 = vlaneseq
        %v1047 = vshrl.u32 %v1046, 7
        %v1048 = vsub.s32 0, %v1047
        %v1049 = vrot.slane %v225, %v1048
        %v1051 = vmul.f32 %v1043, %v1049
        %v1052 = vmul.f32 %v1044, %v1049
        %v1054 = vlaneseq
        %v1055 = vshrl.u32 %v1054, 7
        %v1056 = vsub.s32 0, %v1055
        %v1057 = vrot.slane %v226, %v1056
        %v1059 = vadd.f32 %v1051, %v1057
        %v1060 = vadd.f32 %v1052, %v1057
        %1061 = vmatprep.subr.mxu0 0.0
        %1062 = vmatpush1.msra.mxu0 0.0
        %1063 = vmatprep.subr.mxu0 0.0
        %1064 = vmatpush1.msra.mxu0 0.0
        %1065 = vmatprep.subr.mxu0 0.0
        %1066 = vmatpush1.msra.mxu0 0.0
        %1067 = vmatprep.subr.mxu0 0.0
        %1068 = vmatpush1.msra.mxu0 0.0
        %1069 = vmatprep.subr.mxu0 0.0
        %1070 = vmatpush1.msra.mxu0 0.0
        %1071 = vmatprep.subr.mxu0 0.0
        %1072 = vmatpush1.msra.mxu0 0.0
        %1073 = vmatprep.subr.mxu0 0.0
        %1074 = vmatpush1.msra.mxu0 0.0
        %1075 = vmatprep.subr.mxu0 0.0
        %1076 = vmatpush1.msra.mxu0 0.0
        %1077 = vmatprep.subr.mxu0 0.0
        %1078 = vmatpush1.msra.mxu0 0.0
        %1079 = vmatprep.subr.mxu0 0.0
        %1080 = vmatpush1.msra.mxu0 0.0
        %1081 = vmatprep.subr.mxu0 0.0
        %1082 = vmatpush1.msra.mxu0 0.0
        %1083 = vmatprep.subr.mxu0 0.0
        %1084 = vmatpush1.msra.mxu0 0.0
        %1085 = vmatprep.subr.mxu0 0.0
        %1086 = vmatpush1.msra.mxu0 0.0
        %1087 = vmatprep.subr.mxu0 0.0
        %1088 = vmatpush1.msra.mxu0 0.0
        %1089 = vmatprep.subr.mxu0 0.0
        %1090 = vmatpush1.msra.mxu0 0.0
        %1091 = vmatprep.subr.mxu0 0.0
        %1092 = vmatpush1.msra.mxu0 %v246
        %1093 = vmatprep.subr.mxu0 0.0
        %1094 = vmatpush2.msra.mxu0 0.0
        %1095 = vmatprep.subr.mxu0 0.0
        %1096 = vmatpush2.msra.mxu0 0.0
        %1097 = vmatprep.subr.mxu0 0.0
        %1098 = vmatpush2.msra.mxu0 0.0
        %1099 = vmatprep.subr.mxu0 0.0
        %1100 = vmatpush2.msra.mxu0 0.0
        %1101 = vmatprep.subr.mxu0 0.0
        %1102 = vmatpush2.msra.mxu0 0.0
        %1103 = vmatprep.subr.mxu0 0.0
        %1104 = vmatpush2.msra.mxu0 0.0
        %1105 = vmatprep.subr.mxu0 0.0
        %1106 = vmatpush2.msra.mxu0 0.0
        %1107 = vmatprep.subr.mxu0 0.0
        %1108 = vmatpush2.msra.mxu0 0.0
        %1109 = vmatprep.subr.mxu0 0.0
        %1110 = vmatpush2.msra.mxu0 0.0
        %1111 = vmatprep.subr.mxu0 0.0
        %1112 = vmatpush2.msra.mxu0 0.0
        %1113 = vmatprep.subr.mxu0 0.0
        %1114 = vmatpush2.msra.mxu0 0.0
        %1115 = vmatprep.subr.mxu0 0.0
        %1116 = vmatpush2.msra.mxu0 0.0
        %1117 = vmatprep.subr.mxu0 0.0
        %1118 = vmatpush2.msra.mxu0 0.0
        %1119 = vmatprep.subr.mxu0 0.0
        %1120 = vmatpush2.msra.mxu0 0.0
        %1121 = vmatprep.subr.mxu0 0.0
        %1122 = vmatpush2.msra.mxu0 0.0
        %1123 = vmatprep.subr.mxu0 0.0
        %1124 = vmatpush2.msra.mxu0 0.0
        %1125 = vmatprep.mubr.f32.mxu0 0.0
        %1126 = vmatmul.mubr.f32.gmra.mxu0 %v593
        %v1127 = vpop.f32.mrf.mxu0
        %v1128 = vadd.f32 0.0, %v1127
        %v1129 = vpop.f32.mrf.mxu0
        %1130 = vmatprep.mubr.f32.mxu0 0.0
        %1131 = vmatmul.mubr.f32.gmra.mxu0 %v595
        %v1132 = vpop.f32.mrf.mxu0
        %v1133 = vadd.f32 0.0, %v1132
        %v1134 = vpop.f32.mrf.mxu0
        %1135 = vdwg.mxu0
        %1136 = vmatprep.subr.mxu0 0.0
        %1137 = vmatpush1.msra.mxu0 0.0
        %1138 = vmatprep.subr.mxu0 0.0
        %1139 = vmatpush1.msra.mxu0 0.0
        %1140 = vmatprep.subr.mxu0 0.0
        %1141 = vmatpush1.msra.mxu0 0.0
        %1142 = vmatprep.subr.mxu0 0.0
        %1143 = vmatpush1.msra.mxu0 0.0
        %1144 = vmatprep.subr.mxu0 0.0
        %1145 = vmatpush1.msra.mxu0 0.0
        %1146 = vmatprep.subr.mxu0 0.0
        %1147 = vmatpush1.msra.mxu0 0.0
        %1148 = vmatprep.subr.mxu0 0.0
        %1149 = vmatpush1.msra.mxu0 0.0
        %1150 = vmatprep.subr.mxu0 0.0
        %1151 = vmatpush1.msra.mxu0 0.0
        %1152 = vmatprep.subr.mxu0 0.0
        %1153 = vmatpush1.msra.mxu0 0.0
        %1154 = vmatprep.subr.mxu0 0.0
        %1155 = vmatpush1.msra.mxu0 0.0
        %1156 = vmatprep.subr.mxu0 0.0
        %1157 = vmatpush1.msra.mxu0 0.0
        %1158 = vmatprep.subr.mxu0 0.0
        %1159 = vmatpush1.msra.mxu0 0.0
        %1160 = vmatprep.subr.mxu0 0.0
        %1161 = vmatpush1.msra.mxu0 0.0
        %1162 = vmatprep.subr.mxu0 0.0
        %1163 = vmatpush1.msra.mxu0 0.0
        %1164 = vmatprep.subr.mxu0 0.0
        %1165 = vmatpush1.msra.mxu0 0.0
        %1166 = vmatprep.subr.mxu0 0.0
        %1167 = vmatpush1.msra.mxu0 %v328
        %1168 = vmatprep.subr.mxu0 0.0
        %1169 = vmatpush2.msra.mxu0 0.0
        %1170 = vmatprep.subr.mxu0 0.0
        %1171 = vmatpush2.msra.mxu0 0.0
        %1172 = vmatprep.subr.mxu0 0.0
        %1173 = vmatpush2.msra.mxu0 0.0
        %1174 = vmatprep.subr.mxu0 0.0
        %1175 = vmatpush2.msra.mxu0 0.0
        %1176 = vmatprep.subr.mxu0 0.0
        %1177 = vmatpush2.msra.mxu0 0.0
        %1178 = vmatprep.subr.mxu0 0.0
        %1179 = vmatpush2.msra.mxu0 0.0
        %1180 = vmatprep.subr.mxu0 0.0
        %1181 = vmatpush2.msra.mxu0 0.0
        %1182 = vmatprep.subr.mxu0 0.0
        %1183 = vmatpush2.msra.mxu0 0.0
        %1184 = vmatprep.subr.mxu0 0.0
        %1185 = vmatpush2.msra.mxu0 0.0
        %1186 = vmatprep.subr.mxu0 0.0
        %1187 = vmatpush2.msra.mxu0 0.0
        %1188 = vmatprep.subr.mxu0 0.0
        %1189 = vmatpush2.msra.mxu0 0.0
        %1190 = vmatprep.subr.mxu0 0.0
        %1191 = vmatpush2.msra.mxu0 0.0
        %1192 = vmatprep.subr.mxu0 0.0
        %1193 = vmatpush2.msra.mxu0 0.0
        %1194 = vmatprep.subr.mxu0 0.0
        %1195 = vmatpush2.msra.mxu0 0.0
        %1196 = vmatprep.subr.mxu0 0.0
        %1197 = vmatpush2.msra.mxu0 0.0
        %1198 = vmatprep.subr.mxu0 0.0
        %1199 = vmatpush2.msra.mxu0 0.0
        %1200 = vmatprep.mubr.f32.mxu0 0.0
        %1201 = vmatmul.mubr.f32.gmra.mxu0 %v500
        %v1202 = vpop.f32.mrf.mxu0
        %v1203 = vadd.f32 %v1128, %v1202
        %v1204 = vpop.f32.mrf.mxu0
        %1205 = vmatprep.mubr.f32.mxu0 0.0
        %1206 = vmatmul.mubr.f32.gmra.mxu0 %v503
        %v1207 = vpop.f32.mrf.mxu0
        %v1208 = vadd.f32 %v1133, %v1207
        %v1209 = vpop.f32.mrf.mxu0
        %1210 = vdwg.mxu0
        %1211 = vmatprep.subr.mxu0 0.0
        %1212 = vmatpush1.msra.mxu0 0.0
        %1213 = vmatprep.subr.mxu0 0.0
        %1214 = vmatpush1.msra.mxu0 0.0
        %1215 = vmatprep.subr.mxu0 0.0
        %1216 = vmatpush1.msra.mxu0 0.0
        %1217 = vmatprep.subr.mxu0 0.0
        %1218 = vmatpush1.msra.mxu0 0.0
        %1219 = vmatprep.subr.mxu0 0.0
        %1220 = vmatpush1.msra.mxu0 0.0
        %1221 = vmatprep.subr.mxu0 0.0
        %1222 = vmatpush1.msra.mxu0 0.0
        %1223 = vmatprep.subr.mxu0 0.0
        %1224 = vmatpush1.msra.mxu0 0.0
        %1225 = vmatprep.subr.mxu0 0.0
        %1226 = vmatpush1.msra.mxu0 0.0
        %1227 = vmatprep.subr.mxu0 0.0
        %1228 = vmatpush1.msra.mxu0 0.0
        %1229 = vmatprep.subr.mxu0 0.0
        %1230 = vmatpush1.msra.mxu0 0.0
        %1231 = vmatprep.subr.mxu0 0.0
        %1232 = vmatpush1.msra.mxu0 0.0
        %1233 = vmatprep.subr.mxu0 0.0
        %1234 = vmatpush1.msra.mxu0 0.0
        %1235 = vmatprep.subr.mxu0 0.0
        %1236 = vmatpush1.msra.mxu0 0.0
        %1237 = vmatprep.subr.mxu0 0.0
        %1238 = vmatpush1.msra.mxu0 0.0
        %1239 = vmatprep.subr.mxu0 0.0
        %1240 = vmatpush1.msra.mxu0 0.0
        %1241 = vmatprep.subr.mxu0 0.0
        %1242 = vmatpush1.msra.mxu0 %v418
        %1243 = vmatprep.subr.mxu0 0.0
        %1244 = vmatpush2.msra.mxu0 0.0
        %1245 = vmatprep.subr.mxu0 0.0
        %1246 = vmatpush2.msra.mxu0 0.0
        %1247 = vmatprep.subr.mxu0 0.0
        %1248 = vmatpush2.msra.mxu0 0.0
        %1249 = vmatprep.subr.mxu0 0.0
        %1250 = vmatpush2.msra.mxu0 0.0
        %1251 = vmatprep.subr.mxu0 0.0
        %1252 = vmatpush2.msra.mxu0 0.0
        %1253 = vmatprep.subr.mxu0 0.0
        %1254 = vmatpush2.msra.mxu0 0.0
        %1255 = vmatprep.subr.mxu0 0.0
        %1256 = vmatpush2.msra.mxu0 0.0
        %1257 = vmatprep.subr.mxu0 0.0
        %1258 = vmatpush2.msra.mxu0 0.0
        %1259 = vmatprep.subr.mxu0 0.0
        %1260 = vmatpush2.msra.mxu0 0.0
        %1261 = vmatprep.subr.mxu0 0.0
        %1262 = vmatpush2.msra.mxu0 0.0
        %1263 = vmatprep.subr.mxu0 0.0
        %1264 = vmatpush2.msra.mxu0 0.0
        %1265 = vmatprep.subr.mxu0 0.0
        %1266 = vmatpush2.msra.mxu0 0.0
        %1267 = vmatprep.subr.mxu0 0.0
        %1268 = vmatpush2.msra.mxu0 0.0
        %1269 = vmatprep.subr.mxu0 0.0
        %1270 = vmatpush2.msra.mxu0 0.0
        %1271 = vmatprep.subr.mxu0 0.0
        %1272 = vmatpush2.msra.mxu0 0.0
        %1273 = vmatprep.subr.mxu0 0.0
        %1274 = vmatpush2.msra.mxu0 0.0
        %1275 = vmatprep.mubr.f32.mxu0 0.0
        %1276 = vmatmul.mubr.f32.gmra.mxu0 %v684
        %v1277 = vpop.f32.mrf.mxu0
        %v1278 = vadd.f32 0.0, %v1277
        %v1279 = vpop.f32.mrf.mxu0
        %1280 = vmatprep.mubr.f32.mxu0 0.0
        %1281 = vmatmul.mubr.f32.gmra.mxu0 %v686
        %v1282 = vpop.f32.mrf.mxu0
        %v1283 = vadd.f32 0.0, %v1282
        %v1284 = vpop.f32.mrf.mxu0
        %1285 = vdwg.mxu0
        %v1286 = vadd.f32 %v1203, %v1278
        %v1287 = vadd.f32 %v1208, %v1283
        %1288 = vmatprep.subr.mxu0 0.0
        %1289 = vmatpush1.msra.mxu0 0.0
        %1290 = vmatprep.subr.mxu0 0.0
        %1291 = vmatpush1.msra.mxu0 0.0
        %1292 = vmatprep.subr.mxu0 0.0
        %1293 = vmatpush1.msra.mxu0 0.0
        %1294 = vmatprep.subr.mxu0 0.0
        %1295 = vmatpush1.msra.mxu0 0.0
        %1296 = vmatprep.subr.mxu0 0.0
        %1297 = vmatpush1.msra.mxu0 0.0
        %1298 = vmatprep.subr.mxu0 0.0
        %1299 = vmatpush1.msra.mxu0 0.0
        %1300 = vmatprep.subr.mxu0 0.0
        %1301 = vmatpush1.msra.mxu0 0.0
        %1302 = vmatprep.subr.mxu0 0.0
        %1303 = vmatpush1.msra.mxu0 0.0
        %1304 = vmatprep.subr.mxu0 0.0
        %1305 = vmatpush1.msra.mxu0 0.0
        %1306 = vmatprep.subr.mxu0 0.0
        %1307 = vmatpush1.msra.mxu0 0.0
        %1308 = vmatprep.subr.mxu0 0.0
        %1309 = vmatpush1.msra.mxu0 0.0
        %1310 = vmatprep.subr.mxu0 0.0
        %1311 = vmatpush1.msra.mxu0 0.0
        %1312 = vmatprep.subr.mxu0 0.0
        %1313 = vmatpush1.msra.mxu0 0.0
        %1314 = vmatprep.subr.mxu0 0.0
        %1315 = vmatpush1.msra.mxu0 0.0
        %1316 = vmatprep.subr.mxu0 0.0
        %1317 = vmatpush1.msra.mxu0 0.0
        %1318 = vmatprep.subr.mxu0 0.0
        %1319 = vmatpush1.msra.mxu0 %v506
        %1320 = vmatprep.subr.mxu0 0.0
        %1321 = vmatpush2.msra.mxu0 0.0
        %1322 = vmatprep.subr.mxu0 0.0
        %1323 = vmatpush2.msra.mxu0 0.0
        %1324 = vmatprep.subr.mxu0 0.0
        %1325 = vmatpush2.msra.mxu0 0.0
        %1326 = vmatprep.subr.mxu0 0.0
        %1327 = vmatpush2.msra.mxu0 0.0
        %1328 = vmatprep.subr.mxu0 0.0
        %1329 = vmatpush2.msra.mxu0 0.0
        %1330 = vmatprep.subr.mxu0 0.0
        %1331 = vmatpush2.msra.mxu0 0.0
        %1332 = vmatprep.subr.mxu0 0.0
        %1333 = vmatpush2.msra.mxu0 0.0
        %1334 = vmatprep.subr.mxu0 0.0
        %1335 = vmatpush2.msra.mxu0 0.0
        %1336 = vmatprep.subr.mxu0 0.0
        %1337 = vmatpush2.msra.mxu0 0.0
        %1338 = vmatprep.subr.mxu0 0.0
        %1339 = vmatpush2.msra.mxu0 0.0
        %1340 = vmatprep.subr.mxu0 0.0
        %1341 = vmatpush2.msra.mxu0 0.0
        %1342 = vmatprep.subr.mxu0 0.0
        %1343 = vmatpush2.msra.mxu0 0.0
        %1344 = vmatprep.subr.mxu0 0.0
        %1345 = vmatpush2.msra.mxu0 0.0
        %1346 = vmatprep.subr.mxu0 0.0
        %1347 = vmatpush2.msra.mxu0 0.0
        %1348 = vmatprep.subr.mxu0 0.0
        %1349 = vmatpush2.msra.mxu0 0.0
        %1350 = vmatprep.subr.mxu0 0.0
        %1351 = vmatpush2.msra.mxu0 0.0
        %1352 = vmatprep.mubr.f32.mxu0 0.0
        %1353 = vmatmul.mubr.f32.gmra.mxu0 %v771
        %v1354 = vpop.f32.mrf.mxu0
        %v1355 = vadd.f32 0.0, %v1354
        %v1356 = vpop.f32.mrf.mxu0
        %1357 = vmatprep.mubr.f32.mxu0 0.0
        %1358 = vmatmul.mubr.f32.gmra.mxu0 %v774
        %v1359 = vpop.f32.mrf.mxu0
        %v1360 = vadd.f32 0.0, %v1359
        %v1361 = vpop.f32.mrf.mxu0
        %1362 = vdwg.mxu0
        %v1363 = vadd.f32 %v1286, %v1355
        %v1364 = vadd.f32 %v1287, %v1360
        %1365 = vmatprep.subr.mxu0 0.0
        %1366 = vmatpush1.msra.mxu0 0.0
        %1367 = vmatprep.subr.mxu0 0.0
        %1368 = vmatpush1.msra.mxu0 0.0
        %1369 = vmatprep.subr.mxu0 0.0
        %1370 = vmatpush1.msra.mxu0 0.0
        %1371 = vmatprep.subr.mxu0 0.0
        %1372 = vmatpush1.msra.mxu0 0.0
        %1373 = vmatprep.subr.mxu0 0.0
        %1374 = vmatpush1.msra.mxu0 0.0
        %1375 = vmatprep.subr.mxu0 0.0
        %1376 = vmatpush1.msra.mxu0 0.0
        %1377 = vmatprep.subr.mxu0 0.0
        %1378 = vmatpush1.msra.mxu0 0.0
        %1379 = vmatprep.subr.mxu0 0.0
        %1380 = vmatpush1.msra.mxu0 0.0
        %1381 = vmatprep.subr.mxu0 0.0
        %1382 = vmatpush1.msra.mxu0 0.0
        %1383 = vmatprep.subr.mxu0 0.0
        %1384 = vmatpush1.msra.mxu0 0.0
        %1385 = vmatprep.subr.mxu0 0.0
        %1386 = vmatpush1.msra.mxu0 0.0
        %1387 = vmatprep.subr.mxu0 0.0
        %1388 = vmatpush1.msra.mxu0 0.0
        %1389 = vmatprep.subr.mxu0 0.0
        %1390 = vmatpush1.msra.mxu0 0.0
        %1391 = vmatprep.subr.mxu0 0.0
        %1392 = vmatpush1.msra.mxu0 0.0
        %1393 = vmatprep.subr.mxu0 0.0
        %1394 = vmatpush1.msra.mxu0 0.0
        %1395 = vmatprep.subr.mxu0 0.0
        %1396 = vmatpush1.msra.mxu0 %v598
        %1397 = vmatprep.subr.mxu0 0.0
        %1398 = vmatpush2.msra.mxu0 0.0
        %1399 = vmatprep.subr.mxu0 0.0
        %1400 = vmatpush2.msra.mxu0 0.0
        %1401 = vmatprep.subr.mxu0 0.0
        %1402 = vmatpush2.msra.mxu0 0.0
        %1403 = vmatprep.subr.mxu0 0.0
        %1404 = vmatpush2.msra.mxu0 0.0
        %1405 = vmatprep.subr.mxu0 0.0
        %1406 = vmatpush2.msra.mxu0 0.0
        %1407 = vmatprep.subr.mxu0 0.0
        %1408 = vmatpush2.msra.mxu0 0.0
        %1409 = vmatprep.subr.mxu0 0.0
        %1410 = vmatpush2.msra.mxu0 0.0
        %1411 = vmatprep.subr.mxu0 0.0
        %1412 = vmatpush2.msra.mxu0 0.0
        %1413 = vmatprep.subr.mxu0 0.0
        %1414 = vmatpush2.msra.mxu0 0.0
        %1415 = vmatprep.subr.mxu0 0.0
        %1416 = vmatpush2.msra.mxu0 0.0
        %1417 = vmatprep.subr.mxu0 0.0
        %1418 = vmatpush2.msra.mxu0 0.0
        %1419 = vmatprep.subr.mxu0 0.0
        %1420 = vmatpush2.msra.mxu0 0.0
        %1421 = vmatprep.subr.mxu0 0.0
        %1422 = vmatpush2.msra.mxu0 0.0
        %1423 = vmatprep.subr.mxu0 0.0
        %1424 = vmatpush2.msra.mxu0 0.0
        %1425 = vmatprep.subr.mxu0 0.0
        %1426 = vmatpush2.msra.mxu0 0.0
        %1427 = vmatprep.subr.mxu0 0.0
        %1428 = vmatpush2.msra.mxu0 0.0
        %1429 = vmatprep.mubr.f32.mxu0 0.0
        %1430 = vmatmul.mubr.f32.gmra.mxu0 %v864
        %v1431 = vpop.f32.mrf.mxu0
        %v1432 = vadd.f32 0.0, %v1431
        %v1433 = vpop.f32.mrf.mxu0
        %1434 = vmatprep.mubr.f32.mxu0 0.0
        %1435 = vmatmul.mubr.f32.gmra.mxu0 %v866
        %v1436 = vpop.f32.mrf.mxu0
        %v1437 = vadd.f32 0.0, %v1436
        %v1438 = vpop.f32.mrf.mxu0
        %1439 = vdwg.mxu0
        %v1440 = vadd.f32 %v1363, %v1432
        %v1441 = vadd.f32 %v1364, %v1437
        %1442 = vmatprep.subr.mxu0 0.0
        %1443 = vmatpush1.msra.mxu0 0.0
        %1444 = vmatprep.subr.mxu0 0.0
        %1445 = vmatpush1.msra.mxu0 0.0
        %1446 = vmatprep.subr.mxu0 0.0
        %1447 = vmatpush1.msra.mxu0 0.0
        %1448 = vmatprep.subr.mxu0 0.0
        %1449 = vmatpush1.msra.mxu0 0.0
        %1450 = vmatprep.subr.mxu0 0.0
        %1451 = vmatpush1.msra.mxu0 0.0
        %1452 = vmatprep.subr.mxu0 0.0
        %1453 = vmatpush1.msra.mxu0 0.0
        %1454 = vmatprep.subr.mxu0 0.0
        %1455 = vmatpush1.msra.mxu0 0.0
        %1456 = vmatprep.subr.mxu0 0.0
        %1457 = vmatpush1.msra.mxu0 0.0
        %1458 = vmatprep.subr.mxu0 0.0
        %1459 = vmatpush1.msra.mxu0 0.0
        %1460 = vmatprep.subr.mxu0 0.0
        %1461 = vmatpush1.msra.mxu0 0.0
        %1462 = vmatprep.subr.mxu0 0.0
        %1463 = vmatpush1.msra.mxu0 0.0
        %1464 = vmatprep.subr.mxu0 0.0
        %1465 = vmatpush1.msra.mxu0 0.0
        %1466 = vmatprep.subr.mxu0 0.0
        %1467 = vmatpush1.msra.mxu0 0.0
        %1468 = vmatprep.subr.mxu0 0.0
        %1469 = vmatpush1.msra.mxu0 0.0
        %1470 = vmatprep.subr.mxu0 0.0
        %1471 = vmatpush1.msra.mxu0 0.0
        %1472 = vmatprep.subr.mxu0 0.0
        %1473 = vmatpush1.msra.mxu0 %v689
        %1474 = vmatprep.subr.mxu0 0.0
        %1475 = vmatpush2.msra.mxu0 0.0
        %1476 = vmatprep.subr.mxu0 0.0
        %1477 = vmatpush2.msra.mxu0 0.0
        %1478 = vmatprep.subr.mxu0 0.0
        %1479 = vmatpush2.msra.mxu0 0.0
        %1480 = vmatprep.subr.mxu0 0.0
        %1481 = vmatpush2.msra.mxu0 0.0
        %1482 = vmatprep.subr.mxu0 0.0
        %1483 = vmatpush2.msra.mxu0 0.0
        %1484 = vmatprep.subr.mxu0 0.0
        %1485 = vmatpush2.msra.mxu0 0.0
        %1486 = vmatprep.subr.mxu0 0.0
        %1487 = vmatpush2.msra.mxu0 0.0
        %1488 = vmatprep.subr.mxu0 0.0
        %1489 = vmatpush2.msra.mxu0 0.0
        %1490 = vmatprep.subr.mxu0 0.0
        %1491 = vmatpush2.msra.mxu0 0.0
        %1492 = vmatprep.subr.mxu0 0.0
        %1493 = vmatpush2.msra.mxu0 0.0
        %1494 = vmatprep.subr.mxu0 0.0
        %1495 = vmatpush2.msra.mxu0 0.0
        %1496 = vmatprep.subr.mxu0 0.0
        %1497 = vmatpush2.msra.mxu0 0.0
        %1498 = vmatprep.subr.mxu0 0.0
        %1499 = vmatpush2.msra.mxu0 0.0
        %1500 = vmatprep.subr.mxu0 0.0
        %1501 = vmatpush2.msra.mxu0 0.0
        %1502 = vmatprep.subr.mxu0 0.0
        %1503 = vmatpush2.msra.mxu0 0.0
        %1504 = vmatprep.subr.mxu0 0.0
        %1505 = vmatpush2.msra.mxu0 0.0
        %1506 = vmatprep.mubr.f32.mxu0 0.0
        %1507 = vmatmul.mubr.f32.gmra.mxu0 %v955
        %v1508 = vpop.f32.mrf.mxu0
        %v1509 = vadd.f32 0.0, %v1508
        %v1510 = vpop.f32.mrf.mxu0
        %1511 = vmatprep.mubr.f32.mxu0 0.0
        %1512 = vmatmul.mubr.f32.gmra.mxu0 %v957
        %v1513 = vpop.f32.mrf.mxu0
        %v1514 = vadd.f32 0.0, %v1513
        %v1515 = vpop.f32.mrf.mxu0
        %1516 = vdwg.mxu0
        %v1517 = vadd.f32 %v1440, %v1509
        %v1518 = vadd.f32 %v1441, %v1514
        %v1520 = vsel %vm239, %v222, 0
        %v1523 = vsel %vm239, %v223, 0
        %1525 = vmatprep.subr.mxu0 0.0
        %1526 = vmatpush1.msra.mxu0 0.0
        %1527 = vmatprep.subr.mxu0 0.0
        %1528 = vmatpush1.msra.mxu0 0.0
        %1529 = vmatprep.subr.mxu0 0.0
        %1530 = vmatpush1.msra.mxu0 0.0
        %1531 = vmatprep.subr.mxu0 0.0
        %1532 = vmatpush1.msra.mxu0 0.0
        %1533 = vmatprep.subr.mxu0 0.0
        %1534 = vmatpush1.msra.mxu0 0.0
        %1535 = vmatprep.subr.mxu0 0.0
        %1536 = vmatpush1.msra.mxu0 0.0
        %1537 = vmatprep.subr.mxu0 0.0
        %1538 = vmatpush1.msra.mxu0 0.0
        %1539 = vmatprep.subr.mxu0 0.0
        %1540 = vmatpush1.msra.mxu0 0.0
        %1541 = vmatprep.subr.mxu0 0.0
        %1542 = vmatpush1.msra.mxu0 0.0
        %1543 = vmatprep.subr.mxu0 0.0
        %1544 = vmatpush1.msra.mxu0 0.0
        %1545 = vmatprep.subr.mxu0 0.0
        %1546 = vmatpush1.msra.mxu0 0.0
        %1547 = vmatprep.subr.mxu0 0.0
        %1548 = vmatpush1.msra.mxu0 0.0
        %1549 = vmatprep.subr.mxu0 0.0
        %1550 = vmatpush1.msra.mxu0 0.0
        %1551 = vmatprep.subr.mxu0 0.0
        %1552 = vmatpush1.msra.mxu0 0.0
        %1553 = vmatprep.subr.mxu0 0.0
        %1554 = vmatpush1.msra.mxu0 0.0
        %1555 = vmatprep.subr.mxu0 0.0
        %1556 = vmatpush1.msra.mxu0 %v777
        %1557 = vmatprep.subr.mxu0 0.0
        %1558 = vmatpush2.msra.mxu0 0.0
        %1559 = vmatprep.subr.mxu0 0.0
        %1560 = vmatpush2.msra.mxu0 0.0
        %1561 = vmatprep.subr.mxu0 0.0
        %1562 = vmatpush2.msra.mxu0 0.0
        %1563 = vmatprep.subr.mxu0 0.0
        %1564 = vmatpush2.msra.mxu0 0.0
        %1565 = vmatprep.subr.mxu0 0.0
        %1566 = vmatpush2.msra.mxu0 0.0
        %1567 = vmatprep.subr.mxu0 0.0
        %1568 = vmatpush2.msra.mxu0 0.0
        %1569 = vmatprep.subr.mxu0 0.0
        %1570 = vmatpush2.msra.mxu0 0.0
        %1571 = vmatprep.subr.mxu0 0.0
        %1572 = vmatpush2.msra.mxu0 0.0
        %1573 = vmatprep.subr.mxu0 0.0
        %1574 = vmatpush2.msra.mxu0 0.0
        %1575 = vmatprep.subr.mxu0 0.0
        %1576 = vmatpush2.msra.mxu0 0.0
        %1577 = vmatprep.subr.mxu0 0.0
        %1578 = vmatpush2.msra.mxu0 0.0
        %1579 = vmatprep.subr.mxu0 0.0
        %1580 = vmatpush2.msra.mxu0 0.0
        %1581 = vmatprep.subr.mxu0 0.0
        %1582 = vmatpush2.msra.mxu0 0.0
        %1583 = vmatprep.subr.mxu0 0.0
        %1584 = vmatpush2.msra.mxu0 0.0
        %1585 = vmatprep.subr.mxu0 0.0
        %1586 = vmatpush2.msra.mxu0 0.0
        %1587 = vmatprep.subr.mxu0 0.0
        %1588 = vmatpush2.msra.mxu0 0.0
        %1589 = vmatprep.mubr.f32.mxu0 0.0
        %1590 = vmatmul.mubr.f32.gmra.mxu0 %v1520
        %v1591 = vpop.f32.mrf.mxu0
        %v1592 = vadd.f32 0.0, %v1591
        %v1593 = vpop.f32.mrf.mxu0
        %1594 = vmatprep.mubr.f32.mxu0 0.0
        %1595 = vmatmul.mubr.f32.gmra.mxu0 %v1523
        %v1596 = vpop.f32.mrf.mxu0
        %v1597 = vadd.f32 0.0, %v1596
        %v1598 = vpop.f32.mrf.mxu0
        %1599 = vdwg.mxu0
        %v1600 = vadd.f32 %v1517, %v1592
        %v1601 = vadd.f32 %v1518, %v1597
        %v1603 = vrot.slane %v222, 1
        %v1604 = vrot.slane %v223, 1
        %v1605 = vsel %vm233, %v1603, %v1604
        %v1606 = vrot.slane %v224, 1
        %v1607 = vsel %vm233, %v1604, %v1606
        %v1608 = vsel %vm239, %v1605, 0
        %v1610 = vsel %vm239, %v1607, 0
        %1612 = vmatprep.subr.mxu0 0.0
        %1613 = vmatpush1.msra.mxu0 0.0
        %1614 = vmatprep.subr.mxu0 0.0
        %1615 = vmatpush1.msra.mxu0 0.0
        %1616 = vmatprep.subr.mxu0 0.0
        %1617 = vmatpush1.msra.mxu0 0.0
        %1618 = vmatprep.subr.mxu0 0.0
        %1619 = vmatpush1.msra.mxu0 0.0
        %1620 = vmatprep.subr.mxu0 0.0
        %1621 = vmatpush1.msra.mxu0 0.0
        %1622 = vmatprep.subr.mxu0 0.0
        %1623 = vmatpush1.msra.mxu0 0.0
        %1624 = vmatprep.subr.mxu0 0.0
        %1625 = vmatpush1.msra.mxu0 0.0
        %1626 = vmatprep.subr.mxu0 0.0
        %1627 = vmatpush1.msra.mxu0 0.0
        %1628 = vmatprep.subr.mxu0 0.0
        %1629 = vmatpush1.msra.mxu0 0.0
        %1630 = vmatprep.subr.mxu0 0.0
        %1631 = vmatpush1.msra.mxu0 0.0
        %1632 = vmatprep.subr.mxu0 0.0
        %1633 = vmatpush1.msra.mxu0 0.0
        %1634 = vmatprep.subr.mxu0 0.0
        %1635 = vmatpush1.msra.mxu0 0.0
        %1636 = vmatprep.subr.mxu0 0.0
        %1637 = vmatpush1.msra.mxu0 0.0
        %1638 = vmatprep.subr.mxu0 0.0
        %1639 = vmatpush1.msra.mxu0 0.0
        %1640 = vmatprep.subr.mxu0 0.0
        %1641 = vmatpush1.msra.mxu0 0.0
        %1642 = vmatprep.subr.mxu0 0.0
        %1643 = vmatpush1.msra.mxu0 %v869
        %1644 = vmatprep.subr.mxu0 0.0
        %1645 = vmatpush2.msra.mxu0 0.0
        %1646 = vmatprep.subr.mxu0 0.0
        %1647 = vmatpush2.msra.mxu0 0.0
        %1648 = vmatprep.subr.mxu0 0.0
        %1649 = vmatpush2.msra.mxu0 0.0
        %1650 = vmatprep.subr.mxu0 0.0
        %1651 = vmatpush2.msra.mxu0 0.0
        %1652 = vmatprep.subr.mxu0 0.0
        %1653 = vmatpush2.msra.mxu0 0.0
        %1654 = vmatprep.subr.mxu0 0.0
        %1655 = vmatpush2.msra.mxu0 0.0
        %1656 = vmatprep.subr.mxu0 0.0
        %1657 = vmatpush2.msra.mxu0 0.0
        %1658 = vmatprep.subr.mxu0 0.0
        %1659 = vmatpush2.msra.mxu0 0.0
        %1660 = vmatprep.subr.mxu0 0.0
        %1661 = vmatpush2.msra.mxu0 0.0
        %1662 = vmatprep.subr.mxu0 0.0
        %1663 = vmatpush2.msra.mxu0 0.0
        %1664 = vmatprep.subr.mxu0 0.0
        %1665 = vmatpush2.msra.mxu0 0.0
        %1666 = vmatprep.subr.mxu0 0.0
        %1667 = vmatpush2.msra.mxu0 0.0
        %1668 = vmatprep.subr.mxu0 0.0
        %1669 = vmatpush2.msra.mxu0 0.0
        %1670 = vmatprep.subr.mxu0 0.0
        %1671 = vmatpush2.msra.mxu0 0.0
        %1672 = vmatprep.subr.mxu0 0.0
        %1673 = vmatpush2.msra.mxu0 0.0
        %1674 = vmatprep.subr.mxu0 0.0
        %1675 = vmatpush2.msra.mxu0 0.0
        %1676 = vmatprep.mubr.f32.mxu0 0.0
        %1677 = vmatmul.mubr.f32.gmra.mxu0 %v1608
        %v1678 = vpop.f32.mrf.mxu0
        %v1679 = vadd.f32 0.0, %v1678
        %v1680 = vpop.f32.mrf.mxu0
        %1681 = vmatprep.mubr.f32.mxu0 0.0
        %1682 = vmatmul.mubr.f32.gmra.mxu0 %v1610
        %v1683 = vpop.f32.mrf.mxu0
        %v1684 = vadd.f32 0.0, %v1683
        %v1685 = vpop.f32.mrf.mxu0
        %1686 = vdwg.mxu0
        %v1687 = vadd.f32 %v1600, %v1679
        %v1688 = vadd.f32 %v1601, %v1684
        %v1689 = vrot.slane %v222, 2
        %v1690 = vrot.slane %v223, 2
        %v1691 = vsel %vm407, %v1689, %v1690
        %v1692 = vrot.slane %v224, 2
        %v1693 = vsel %vm407, %v1690, %v1692
        %v1694 = vsel %vm239, %v1691, 0
        %v1696 = vsel %vm239, %v1693, 0
        %1698 = vmatprep.subr.mxu0 0.0
        %1699 = vmatpush1.msra.mxu0 0.0
        %1700 = vmatprep.subr.mxu0 0.0
        %1701 = vmatpush1.msra.mxu0 0.0
        %1702 = vmatprep.subr.mxu0 0.0
        %1703 = vmatpush1.msra.mxu0 0.0
        %1704 = vmatprep.subr.mxu0 0.0
        %1705 = vmatpush1.msra.mxu0 0.0
        %1706 = vmatprep.subr.mxu0 0.0
        %1707 = vmatpush1.msra.mxu0 0.0
        %1708 = vmatprep.subr.mxu0 0.0
        %1709 = vmatpush1.msra.mxu0 0.0
        %1710 = vmatprep.subr.mxu0 0.0
        %1711 = vmatpush1.msra.mxu0 0.0
        %1712 = vmatprep.subr.mxu0 0.0
        %1713 = vmatpush1.msra.mxu0 0.0
        %1714 = vmatprep.subr.mxu0 0.0
        %1715 = vmatpush1.msra.mxu0 0.0
        %1716 = vmatprep.subr.mxu0 0.0
        %1717 = vmatpush1.msra.mxu0 0.0
        %1718 = vmatprep.subr.mxu0 0.0
        %1719 = vmatpush1.msra.mxu0 0.0
        %1720 = vmatprep.subr.mxu0 0.0
        %1721 = vmatpush1.msra.mxu0 0.0
        %1722 = vmatprep.subr.mxu0 0.0
        %1723 = vmatpush1.msra.mxu0 0.0
        %1724 = vmatprep.subr.mxu0 0.0
        %1725 = vmatpush1.msra.mxu0 0.0
        %1726 = vmatprep.subr.mxu0 0.0
        %1727 = vmatpush1.msra.mxu0 0.0
        %1728 = vmatprep.subr.mxu0 0.0
        %1729 = vmatpush1.msra.mxu0 %v960
        %1730 = vmatprep.subr.mxu0 0.0
        %1731 = vmatpush2.msra.mxu0 0.0
        %1732 = vmatprep.subr.mxu0 0.0
        %1733 = vmatpush2.msra.mxu0 0.0
        %1734 = vmatprep.subr.mxu0 0.0
        %1735 = vmatpush2.msra.mxu0 0.0
        %1736 = vmatprep.subr.mxu0 0.0
        %1737 = vmatpush2.msra.mxu0 0.0
        %1738 = vmatprep.subr.mxu0 0.0
        %1739 = vmatpush2.msra.mxu0 0.0
        %1740 = vmatprep.subr.mxu0 0.0
        %1741 = vmatpush2.msra.mxu0 0.0
        %1742 = vmatprep.subr.mxu0 0.0
        %1743 = vmatpush2.msra.mxu0 0.0
        %1744 = vmatprep.subr.mxu0 0.0
        %1745 = vmatpush2.msra.mxu0 0.0
        %1746 = vmatprep.subr.mxu0 0.0
        %1747 = vmatpush2.msra.mxu0 0.0
        %1748 = vmatprep.subr.mxu0 0.0
        %1749 = vmatpush2.msra.mxu0 0.0
        %1750 = vmatprep.subr.mxu0 0.0
        %1751 = vmatpush2.msra.mxu0 0.0
        %1752 = vmatprep.subr.mxu0 0.0
        %1753 = vmatpush2.msra.mxu0 0.0
        %1754 = vmatprep.subr.mxu0 0.0
        %1755 = vmatpush2.msra.mxu0 0.0
        %1756 = vmatprep.subr.mxu0 0.0
        %1757 = vmatpush2.msra.mxu0 0.0
        %1758 = vmatprep.subr.mxu0 0.0
        %1759 = vmatpush2.msra.mxu0 0.0
        %1760 = vmatprep.subr.mxu0 0.0
        %1761 = vmatpush2.msra.mxu0 0.0
        %1762 = vmatprep.mubr.f32.mxu0 0.0
        %1763 = vmatmul.mubr.f32.gmra.mxu0 %v1694
        %v1764 = vpop.f32.mrf.mxu0
        %v1765 = vadd.f32 0.0, %v1764
        %v1766 = vpop.f32.mrf.mxu0
        %1767 = vmatprep.mubr.f32.mxu0 0.0
        %1768 = vmatmul.mubr.f32.gmra.mxu0 %v1696
        %v1769 = vpop.f32.mrf.mxu0
        %v1770 = vadd.f32 0.0, %v1769
        %v1771 = vpop.f32.mrf.mxu0
        %1772 = vdwg.mxu0
        %v1773 = vadd.f32 %v1687, %v1765
        %v1774 = vadd.f32 %v1688, %v1770
        %vm1775 = vcmp.gt.f32.partialorder %v1773, 0.0
        %vm1776 = vcmp.gt.f32.partialorder %v1774, 0.0
        %v1777 = vmul.f32 %v1773, 0.01
        %v1778 = vmul.f32 %v1774, 0.01
        %v1779 = vsel %vm1775, %v1773, %v1777
        %v1780 = vsel %vm1776, %v1774, %v1778
        %v1781 = vmul.f32 %v1779, %v1049
        %v1782 = vmul.f32 %v1780, %v1049
        %v1783 = vadd.f32 %v1781, %v1057
        %v1784 = vadd.f32 %v1782, %v1057
        %v1785 = vmax.f32 %v1059, %v1783
        %v1786 = vmax.f32 %v1060, %v1784
        %vm1787 = vcmask 64512
        %1788 = vst.msk [vmem:[#allocation2] sm:$0xff] %vm1787, %v1785
        %1789 = vst.msk [vmem:[#allocation2 + $0x8] sm:$0xff] %vm1787, %v1786
        %v1790 = vld [vmem:[#allocation2] ss:$2 sm:$0xff]
        %s1791 = scalar_lea.vmem [#allocation2], 1
        %v1792 = vld [vmem:[%s1791] ss:$2 sm:$0xff]
        %v1793 = vmax.f32 %v1790, %v1792
        %1794 = vst.msk [vmem:[%s204] sm:$0xff] %vm1787, %v1793
        %s1795 = sand.u32 %s129, 1
        %s1796 = scalar_lea.sflag [#allocation4], %s1795
        %s1797 = sand.u32 %s129, 1
        %s1798 = smul.addr %s1797, 8
        %s1799 = scalar_lea.vmem [#allocation3], %s1798
        // Predicated region
        $region37: #{tpu_custom_call.1} parent=35 // pred_check
          %p1800 = pneg %p139
        $region38: #{tpu_custom_call.1} parent=35 // pred_check_branch
          %1802 = sbr.rel (%p1800) target = $region40
        $region39: #{tpu_custom_call.1} parent=35 // pred_region
          %s1804 = ssub.s32 128, 128
          %1805 = vsyncadd %s1796, %s1804
          %s1806 = smul.addr %s22, 8
          %s1807 = sadd.s32 %s23, %s1806
          %s1808 = smul.addr %s1807, 128
          %s1809 = scalar_lea.hbm %s4, %s1808
          %s1811 = sshll.u32 %s1799, 4
          %s1812 = int_to_ptr.vmem [resolvable:$true] %s1811
          %1814 = dma.vmem_to_hbm [thread:$0]  %s1812, 128, %s1809, %s1796
        $region40: #{tpu_custom_call.1} parent=35 // pred_fallthru
          _
      $region36: #{tpu_custom_call.1} parent=5 // pred_fallthru
        _
      %p1815 = scmp.le.s32.totalorder 2, %s13
      // Predicated region
      $region41: #{tpu_custom_call.1} parent=5 // pred_check
        %p1816 = pneg %p1815
      $region42: #{tpu_custom_call.1} parent=5 // pred_check_branch
        %1818 = sbr.rel (%p1816) target = $region44
      $region43: #{tpu_custom_call.1} parent=5 // pred_region
        %s1819 = ssub.s32 %s13, 2
        // Predicated region
        $region45: #{tpu_custom_call.1} parent=43 // pred_check
          %p1820 = pneg %p145
        $region46: #{tpu_custom_call.1} parent=43 // pred_check_branch
          %1822 = sbr.rel (%p1820) target = $region48
        $region47: #{tpu_custom_call.1} parent=43 // pred_region
          %s1823 = sand.u32 %s130, 1
          %s1824 = scalar_lea.sflag [#allocation4], %s1823
          %s1825 = sand.u32 %s130, 1
          %s1826 = smul.addr %s1825, 8
          %s1827 = scalar_lea.vmem [#allocation3], %s1826
          %1828 = dma.done %s1824, 128
        $region48: #{tpu_custom_call.1} parent=43 // pred_fallthru
          _
      $region44: #{tpu_custom_call.1} parent=5 // pred_fallthru
        _
    $region6: #{tpu_custom_call.1} parent=1 // loop_footer
      %s17 = sadd.s32 1, %s13
    $region7: #{tpu_custom_call.1} parent=1 // loop_footer_branch
      %12 = sbr.rel target = $region3
    $region8: #{tpu_custom_call.1} parent=1 // loop_exit
      _
    %1829 = vsyncpa [#allocation4], 1
    %s1830 = scalar_lea.sflag [#allocation4], 1
    %1831 = vsyncpa %s1830, 1

</llo_original>
